<compile_context>
chip_gen: v7x
topology: tpu7x:2x2x1
jax: 0.10.0
libtpu: 0.0.40
codegen_flags: <defaults>
</compile_context>

<pallas_src>
import numpy as np

import jax
import jax.numpy as jnp
from jax.experimental import pallas as pl
from jax.experimental.pallas import tpu as pltpu


def _round_up(x: int, m: int) -> int:
    return ((x + m - 1) // m) * m


def hypernet_kernel(x_ref, w1_ref, b1_ref, w2_ref, b2_ref, w3_ref, b3_ref,
                    o_ref):
    """One (NS-tile, batch-tile) grid step of the 3-layer MLP.

    x_ref  : (tb, E)   bf16  pipelined batch tile
    w1/b1  : (E, H1) bf16 / (1, H1) f32   whole-array VMEM residents
    w2/b2  : (H1, H2) bf16 / (1, H2) f32  whole-array VMEM residents
    w3/b3  : (H2, tn) bf16 / (1, tn) f32  pipelined NS tiles (double-buffered)
    o_ref  : (tb, tn)  out_dtype (bf16 by default)

    Layers 1-2 are recomputed every step (tiny vs. the layer-3 matmul), so
    there is no cross-step scratch dependency and both grid axes can be
    "parallel" (v7x megacore shards the NS axis even for a single batch tile).
    """
    x = x_ref[...]
    h1 = jnp.dot(x, w1_ref[...], preferred_element_type=jnp.float32)
    h1 = jnp.maximum(h1 + b1_ref[...], 0.0).astype(jnp.bfloat16)
    h2 = jnp.dot(h1, w2_ref[...], preferred_element_type=jnp.float32)
    h2 = jnp.maximum(h2 + b2_ref[...], 0.0).astype(jnp.bfloat16)
    out = jnp.dot(h2, w3_ref[...], preferred_element_type=jnp.float32)
    o_ref[...] = (out + b3_ref[...]).astype(o_ref.dtype)


def _auto_vmem_limit(est_bytes: int) -> int:
    """Generation-aware VMEM limit: headroom below physical capacity."""
    try:
        cap = int(pltpu.get_tpu_info().vmem_capacity_bytes)
    except Exception:
        cap = 64 * 1024 * 1024  # conservative: v7x has 64 MiB per TensorCore
    cap_limit = (cap * 3) // 4  # leave room for Mosaic internal scratch
    return int(min(cap_limit, max(est_bytes + (8 << 20), 32 << 20)))


def prepare_params(params):
    """One-time cast/reshape so the forward path never re-streams w3 in HBM.

    Weights -> bf16 (half the DMA bytes, 2x MXU rate); biases -> (1, H) f32.
    Call this once (e.g. after init / checkpoint load), not per forward call.
    """
    def w(a):
        return a.astype(jnp.bfloat16)

    def b(a):
        return a.reshape(1, -1).astype(jnp.float32)

    return {"w1": w(params["w1"]), "b1": b(params["b1"]),
            "w2": w(params["w2"]), "b2": b(params["b2"]),
            "w3": w(params["w3"]), "b3": b(params["b3"])}


def hypernetworks_forward(x, params, *, batch_tile=512, ns_tile=8192,
                          out_dtype=jnp.bfloat16, vmem_limit_bytes=None):
    """x: (B, task_emb). params: dict of w1,b1,w2,b2,w3,b3 (ideally prepared)."""
    B, E = x.shape
    w1, b1 = params["w1"], params["b1"]
    w2, b2 = params["w2"], params["b2"]
    w3, b3 = params["w3"], params["b3"]
    H1 = w1.shape[1]
    H2 = w2.shape[1]
    NS = w3.shape[1]

    # Casts are statically elided when params came through prepare_params()
    # (dtype checks are on static dtypes, so prepared params cost nothing here).
    cdt = jnp.bfloat16
    if x.dtype != cdt:
        x = x.astype(cdt)
    if w1.dtype != cdt:
        w1 = w1.astype(cdt)
    if w2.dtype != cdt:
        w2 = w2.astype(cdt)
    if w3.dtype != cdt:
        w3 = w3.astype(cdt)
    b1 = b1.reshape(1, H1)
    b2 = b2.reshape(1, H2)
    b3 = b3.reshape(1, NS)
    if b1.dtype != jnp.float32:
        b1 = b1.astype(jnp.float32)
    if b2.dtype != jnp.float32:
        b2 = b2.astype(jnp.float32)
    if b3.dtype != jnp.float32:
        b3 = b3.astype(jnp.float32)

    # MXU/VPU-aligned tiles.  No padding: Pallas masks stores on the partial
    # edge blocks, so (B, NS) need not be tile-divisible.
    tb = min(_round_up(batch_tile, 16), _round_up(B, 16))   # bf16 sublane pack
    tn = min(_round_up(ns_tile, 128), _round_up(NS, 128))   # lane-dense output

    # Grid: NS tiles leading (megacore-sharded), batch tiles innermost.  The
    # w3/b3 block index depends only on the NS axis, so each w3 slab is DMA'd
    # from HBM exactly once even when there are multiple batch tiles.
    n_nt = pl.cdiv(NS, tn)
    n_bt = pl.cdiv(B, tb)
    grid = (n_nt, n_bt)

    out_bytes = np.dtype(out_dtype).itemsize

    # Advisory cost estimate (memory-bound kernel; w3/b3 counted once).
    flops = 2 * B * H2 * NS + n_nt * 2 * (n_bt * tb) * (E * H1 + H1 * H2)
    bytes_accessed = (B * E * 2
                      + (E * H1 + H1 * H2) * 2 + (H1 + H2) * 4
                      + H2 * NS * 2 + NS * 4
                      + B * NS * out_bytes)
    cost = pl.CostEstimate(flops=int(flops), transcendentals=0,
                           bytes_accessed=int(bytes_accessed))

    if vmem_limit_bytes is None:
        resident = (E * H1 + H1 * H2) * 2 + (H1 + H2) * 4
        pipelined = 2 * (tb * E * 2 + H2 * tn * 2 + tn * 4 + tb * tn * out_bytes)
        vmem_limit_bytes = _auto_vmem_limit(resident + pipelined)

    out = pl.pallas_call(
        hypernet_kernel,
        out_shape=jax.ShapeDtypeStruct((B, NS), out_dtype),
        grid_spec=pltpu.PrefetchScalarGridSpec(
            num_scalar_prefetch=0,
            grid=grid,
            in_specs=[
                pl.BlockSpec((tb, E), lambda j, i: (i, 0)),          # x batch tile
                pl.BlockSpec(memory_space=pltpu.MemorySpace.VMEM),   # w1 resident
                pl.BlockSpec(memory_space=pltpu.MemorySpace.VMEM),   # b1 resident
                pl.BlockSpec(memory_space=pltpu.MemorySpace.VMEM),   # w2 resident
                pl.BlockSpec(memory_space=pltpu.MemorySpace.VMEM),   # b2 resident
                pl.BlockSpec((H2, tn), lambda j, i: (0, j)),         # w3 NS tile
                pl.BlockSpec((1, tn), lambda j, i: (0, j)),          # b3 NS tile
            ],
            out_specs=pl.BlockSpec((tb, tn), lambda j, i: (i, j)),
        ),
        compiler_params=pltpu.CompilerParams(
            dimension_semantics=("parallel", "parallel"),
            vmem_limit_bytes=int(vmem_limit_bytes),
        ),
        cost_estimate=cost,
    )(x, w1, b1, w2, b2, w3, b3)

    return out


def init_params(key, task_emb, network_shape):
    """PyTorch nn.Linear default init: uniform(+/- 1/sqrt(fan_in))."""
    def linear(k, fan_in, fan_out):
        kw, kb = jax.random.split(k)
        bound = 1.0 / np.sqrt(fan_in)
        w = jax.random.uniform(kw, (fan_in, fan_out), jnp.float32, -bound, bound)
        b = jax.random.uniform(kb, (fan_out,), jnp.float32, -bound, bound)
        return w, b

    k1, k2, k3 = jax.random.split(key, 3)
    w1, b1 = linear(k1, task_emb, 256)
    w2, b2 = linear(k2, 256, 512)
    w3, b3 = linear(k3, 512, network_shape)
    return {"w1": w1, "b1": b1, "w2": w2, "b2": b2, "w3": w3, "b3": b3}


def reference_forward(x, p, out_dtype=jnp.bfloat16):
    """Pure-JAX reference with identical bf16-input / f32-accumulation math."""
    xb = x.astype(jnp.bfloat16)
    h1 = jnp.dot(xb, p["w1"].astype(jnp.bfloat16),
                 preferred_element_type=jnp.float32) + p["b1"].reshape(1, -1)
    h1 = jnp.maximum(h1, 0.0).astype(jnp.bfloat16)
    h2 = jnp.dot(h1, p["w2"].astype(jnp.bfloat16),
                 preferred_element_type=jnp.float32) + p["b2"].reshape(1, -1)
    h2 = jnp.maximum(h2, 0.0).astype(jnp.bfloat16)
    out = jnp.dot(h2, p["w3"].astype(jnp.bfloat16),
                  preferred_element_type=jnp.float32) + p["b3"].reshape(1, -1)
    return out.astype(out_dtype)


if __name__ == "__main__":
    key = jax.random.PRNGKey(0)
    k_x, k_p = jax.random.split(key)

    TASK_EMB = 32         # task embedding dim
    NETWORK_SHAPE = 320   # flattened target-net param count (not 128-aligned on purpose)
    BATCH = 200           # number of task embeddings (not tile-aligned on purpose)

    x = jax.random.normal(k_x, (BATCH, TASK_EMB), jnp.float32)
    raw_params = init_params(k_p, TASK_EMB, NETWORK_SHAPE)
    params = prepare_params(raw_params)   # one-time bf16 cast, outside the fwd path

    # Small tiles here only so the tiny demo shapes exercise a real 2-D grid
    # (multiple NS tiles, multiple batch tiles, and both partial-edge paths).
    # For production sizes keep the defaults (batch_tile=512, ns_tile=8192).
    out = hypernetworks_forward(x, params, batch_tile=64, ns_tile=128)
    out = jax.block_until_ready(out)

    ref = reference_forward(x, raw_params)
    assert out.shape == (BATCH, NETWORK_SHAPE)
    assert out.dtype == jnp.bfloat16
    err = float(jnp.max(jnp.abs(out.astype(jnp.float32) - ref.astype(jnp.float32))))
    assert err < 5e-2, f"mismatch vs JAX reference (max abs err {err})"

    print("KERNEL_OK")
</pallas_src>

<mosaic_0001>
module attributes {stable_mosaic.version = 11 : i64} {
  func.func @hypernet_kernel(%arg0: i32, %arg1: i32, %arg2: memref<64x32xbf16, #tpu.memory_space<vmem>>, %arg3: memref<32x256xbf16, #tpu.memory_space<vmem>>, %arg4: memref<1x256xf32, #tpu.memory_space<vmem>>, %arg5: memref<256x512xbf16, #tpu.memory_space<vmem>>, %arg6: memref<1x512xf32, #tpu.memory_space<vmem>>, %arg7: memref<512x128xbf16, #tpu.memory_space<vmem>>, %arg8: memref<1x128xf32, #tpu.memory_space<vmem>>, %arg9: memref<64x128xbf16, #tpu.memory_space<vmem>>) attributes {dimension_semantics = [#tpu.dimension_semantics<parallel>, #tpu.dimension_semantics<parallel>], iteration_bounds = array<i64: 3, 4>, scalar_prefetch = 0 : i64, scratch_operands = 0 : i64, tpu.core_type = #tpu.core_type<tc>, window_params = [{transform_indices = @transform_0, window_bounds = array<i64: 64, 32>}, {pipeline_mode = #tpu.pipeline_mode<synchronous>, transform_indices = @transform_1, window_bounds = array<i64: 32, 256>}, {pipeline_mode = #tpu.pipeline_mode<synchronous>, transform_indices = @transform_2, window_bounds = array<i64: 1, 256>}, {pipeline_mode = #tpu.pipeline_mode<synchronous>, transform_indices = @transform_3, window_bounds = array<i64: 256, 512>}, {pipeline_mode = #tpu.pipeline_mode<synchronous>, transform_indices = @transform_4, window_bounds = array<i64: 1, 512>}, {transform_indices = @transform_5, window_bounds = array<i64: 512, 128>}, {transform_indices = @transform_6, window_bounds = array<i64: 1, 128>}, {transform_indices = @transform_7, window_bounds = array<i64: 64, 128>}]} {
    %c0 = arith.constant 0 : index
    %c0_0 = arith.constant 0 : index
    %0 = vector.load %arg2[%c0, %c0_0] : memref<64x32xbf16, #tpu.memory_space<vmem>>, vector<64x32xbf16>
    %c0_1 = arith.constant 0 : index
    %c0_2 = arith.constant 0 : index
    %1 = vector.load %arg3[%c0_1, %c0_2] : memref<32x256xbf16, #tpu.memory_space<vmem>>, vector<32x256xbf16>
    %cst = arith.constant dense<0.000000e+00> : vector<64x256xf32>
    %2 = tpu.matmul %0, %1, %cst {dimension_numbers = #tpu.dot_dimension_numbers<[1], [0], [0], [1], [0, 0, 1, 1], [], []>} : vector<64x32xbf16>, vector<32x256xbf16>, vector<64x256xf32> -> vector<64x256xf32>
    %c0_3 = arith.constant 0 : index
    %c0_4 = arith.constant 0 : index
    %3 = vector.load %arg4[%c0_3, %c0_4] : memref<1x256xf32, #tpu.memory_space<vmem>>, vector<1x256xf32>
    %4 = vector.broadcast %3 : vector<1x256xf32> to vector<64x256xf32>
    %5 = arith.addf %2, %4 : vector<64x256xf32>
    %cst_5 = arith.constant 0.000000e+00 : f32
    %6 = vector.broadcast %cst_5 : f32 to vector<64x256xf32>
    %7 = arith.maximumf %5, %6 : vector<64x256xf32>
    %8 = arith.truncf %7 : vector<64x256xf32> to vector<64x256xbf16>
    %c0_6 = arith.constant 0 : index
    %c0_7 = arith.constant 0 : index
    %9 = vector.load %arg5[%c0_6, %c0_7] : memref<256x512xbf16, #tpu.memory_space<vmem>>, vector<256x512xbf16>
    %cst_8 = arith.constant dense<0.000000e+00> : vector<64x512xf32>
    %10 = tpu.matmul %8, %9, %cst_8 {dimension_numbers = #tpu.dot_dimension_numbers<[1], [0], [0], [1], [0, 0, 1, 1], [], []>} : vector<64x256xbf16>, vector<256x512xbf16>, vector<64x512xf32> -> vector<64x512xf32>
    %c0_9 = arith.constant 0 : index
    %c0_10 = arith.constant 0 : index
    %11 = vector.load %arg6[%c0_9, %c0_10] : memref<1x512xf32, #tpu.memory_space<vmem>>, vector<1x512xf32>
    %12 = vector.broadcast %11 : vector<1x512xf32> to vector<64x512xf32>
    %13 = arith.addf %10, %12 : vector<64x512xf32>
    %cst_11 = arith.constant 0.000000e+00 : f32
    %14 = vector.broadcast %cst_11 : f32 to vector<64x512xf32>
    %15 = arith.maximumf %13, %14 : vector<64x512xf32>
    %16 = arith.truncf %15 : vector<64x512xf32> to vector<64x512xbf16>
    %c0_12 = arith.constant 0 : index
    %c0_13 = arith.constant 0 : index
    %17 = vector.load %arg7[%c0_12, %c0_13] : memref<512x128xbf16, #tpu.memory_space<vmem>>, vector<512x128xbf16>
    %cst_14 = arith.constant dense<0.000000e+00> : vector<64x128xf32>
    %18 = tpu.matmul %16, %17, %cst_14 {dimension_numbers = #tpu.dot_dimension_numbers<[1], [0], [0], [1], [0, 0, 1, 1], [], []>} : vector<64x512xbf16>, vector<512x128xbf16>, vector<64x128xf32> -> vector<64x128xf32>
    %c0_15 = arith.constant 0 : index
    %c0_16 = arith.constant 0 : index
    %19 = vector.load %arg8[%c0_15, %c0_16] : memref<1x128xf32, #tpu.memory_space<vmem>>, vector<1x128xf32>
    %20 = vector.broadcast %19 : vector<1x128xf32> to vector<64x128xf32>
    %21 = arith.addf %18, %20 : vector<64x128xf32>
    %22 = arith.truncf %21 : vector<64x128xf32> to vector<64x128xbf16>
    %c0_17 = arith.constant 0 : index
    %c0_18 = arith.constant 0 : index
    %23 = vector.load %arg9[%c0_17, %c0_18] : memref<64x128xbf16, #tpu.memory_space<vmem>>, vector<64x128xbf16>
    tpu.vector_store %arg9[%c0_17, %c0_18], %22 {strides = array<i32>} : memref<64x128xbf16, #tpu.memory_space<vmem>>, vector<64x128xbf16>,
    return
  }
  func.func @transform_0(%arg0: i32, %arg1: i32) -> (i32, i32) {
    %c0_i32 = arith.constant 0 : i32
    %c0_i32_0 = arith.constant 0 : i32
    return %arg1, %c0_i32 : i32, i32
  }
  func.func @transform_1(%arg0: i32, %arg1: i32) -> (i32, i32) {
    %c0_i32 = arith.constant 0 : i32
    %c0_i32_0 = arith.constant 0 : i32
    %c0_i32_1 = arith.constant 0 : i32
    return %c0_i32, %c0_i32_0 : i32, i32
  }
  func.func @transform_2(%arg0: i32, %arg1: i32) -> (i32, i32) {
    %c0_i32 = arith.constant 0 : i32
    %c0_i32_0 = arith.constant 0 : i32
    %c0_i32_1 = arith.constant 0 : i32
    return %c0_i32, %c0_i32_0 : i32, i32
  }
  func.func @transform_3(%arg0: i32, %arg1: i32) -> (i32, i32) {
    %c0_i32 = arith.constant 0 : i32
    %c0_i32_0 = arith.constant 0 : i32
    %c0_i32_1 = arith.constant 0 : i32
    return %c0_i32, %c0_i32_0 : i32, i32
  }
  func.func @transform_4(%arg0: i32, %arg1: i32) -> (i32, i32) {
    %c0_i32 = arith.constant 0 : i32
    %c0_i32_0 = arith.constant 0 : i32
    %c0_i32_1 = arith.constant 0 : i32
    return %c0_i32, %c0_i32_0 : i32, i32
  }
  func.func @transform_5(%arg0: i32, %arg1: i32) -> (i32, i32) {
    %c0_i32 = arith.constant 0 : i32
    %c0_i32_0 = arith.constant 0 : i32
    return %c0_i32, %arg0 : i32, i32
  }
  func.func @transform_6(%arg0: i32, %arg1: i32) -> (i32, i32) {
    %c0_i32 = arith.constant 0 : i32
    %c0_i32_0 = arith.constant 0 : i32
    return %c0_i32, %arg0 : i32, i32
  }
  func.func @transform_7(%arg0: i32, %arg1: i32) -> (i32, i32) {
    %c0_i32 = arith.constant 0 : i32
    return %arg1, %arg0 : i32, i32
  }
}

</mosaic_0001>

<llo_original>
// kernel: tpu_custom_call.1
$region0: #{tpu_custom_call.1}
  #allocation0 [shape = 'u32[]', space=smem, size = 0x4, offset = 0x4, fixed_abs, tag = 'smem constant byte address 0x4 - core index']
  #allocation1 [shape = 'u32[144,128]{1,0:T(1,128)}', space=vmem, size = 0x12000, scoped, tag = 'internal scratch']
  %s0 = inlined_call_operand.vmem [shape: bf16[200,32], index: 0, kind: input, shape index: {}]
  %s1 = inlined_call_operand.vmem [shape: bf16[32,256], index: 1, kind: input, shape index: {}]
  %s2 = inlined_call_operand.vmem [shape: f32[1,256], index: 2, kind: input, shape index: {}]
  %s3 = inlined_call_operand.vmem [shape: bf16[256,512], index: 3, kind: input, shape index: {}]
  %s4 = inlined_call_operand.vmem [shape: f32[1,512], index: 4, kind: input, shape index: {}]
  %s5 = inlined_call_operand.vmem [shape: bf16[512,320], index: 5, kind: input, shape index: {}]
  %s6 = inlined_call_operand.vmem [shape: f32[1,320], index: 6, kind: input, shape index: {}]
  %s7 = inlined_call_operand.hbm [shape: bf16[200,320], index: 7, kind: output, shape index: {}]
  %s8 = sld [smem:[#allocation0]]
  $region102: #{tpu_custom_call.1} parent=0
    _
  %s10 = ssub.s32 1, %s8
  %s11 = scalar_select 0, %s10, %s8
  $region1: #{tpu_custom_call.1} parent=0
    #allocation2 [shape = 'u8[262144]{0}', space=vmem, size = 0x40000, scoped, tag = 'input window, operand 5']
    #allocation3 [shape = 'u8[32768]{0}', space=vmem, size = 0x8000, scoped, tag = 'output window, operand 0']
    #allocation4 [shape = 's32[2]{0}', space=sflag, size = 0x8, scoped, tag = 'scoped memory for tpu_custom_call.1']
    %12 = vsyncpa [#allocation4], 0
    %s13 = scalar_lea.sflag [#allocation4], 1
    %14 = vsyncpa %s13, 0
    loop: start=0, step=1, limit=14
    $region2: #{tpu_custom_call.1} parent=1 // loop_pre_header
      _
    $region3: #{tpu_custom_call.1} parent=1 // loop_header
      %s16 = sphi 0, %s20
      %p17 = scmp.ge.s32.totalorder %s16, 14
      %s23 = sphi 0, %s35
      %s24 = sphi 0, %s31
      %s25 = sphi 0, %s23
      %s26 = sphi 0, %s24
      %s27 = sphi 0, %s25
      %s28 = sphi 0, %s26
      %s38 = sphi 0, %s40
      %s41 = sphi 0, %s38
      %s42 = sphi 0, %s41
      %s58 = sphi 0, %s42
      %s62 = sphi 0, %s62
      %s64 = sphi 0, %s62
      %s65 = sphi 0, %s64
      %s79 = sphi 0, %s65
      %s83 = sphi 0, %s83
      %s85 = sphi 0, %s83
      %s86 = sphi 0, %s85
      %s100 = sphi 0, %s86
      %s104 = sphi 0, %s104
      %s106 = sphi 0, %s104
      %s107 = sphi 0, %s106
      %s121 = sphi 0, %s107
      %s125 = sphi 0, %s125
      %s127 = sphi 0, %s125
      %s128 = sphi 0, %s127
      %s142 = sphi 0, %s128
      %s148 = sphi 0, %s150
      %s151 = sphi 0, %s148
      %s152 = sphi 0, %s151
      %s168 = sphi 0, %s152
      %s174 = sphi 0, %s176
      %s177 = sphi 0, %s174
      %s178 = sphi 0, %s177
      %s194 = sphi 0, %s178
      %s202 = sphi 0, %s204
      %s205 = sphi 0, %s202
      %s206 = sphi 0, %s205
      %s222 = sphi 0, %s206
    $region4: #{tpu_custom_call.1} parent=1 // loop_header_branch
      %19 = sbr.rel (%p17) target = $region8
    $region5: #{tpu_custom_call.1} parent=1 // loop_body
      %s21 = ssub.s32 %s16, 1
      %s22 = ssub.s32 %s16, 2
      %s29 = sadd.s32 1, %s24
      %p30 = scmp.ge.s32.totalorder %s29, 4
      %s31 = scalar_select %p30, 0, %s29
      %s32 = sadd.s32 1, %s23
      %s33 = scalar_select %p30, %s32, %s23
      %p34 = scmp.ge.s32.totalorder %s33, 3
      %s35 = scalar_select %p34, 0, %s33
      %s36 = ssub.s32 %s24, %s31
      %p37 = scmp.eq.s32.totalorder %s36, 0
      %s39 = sadd.s32 %s38, 1
      %s40 = scalar_select %p37, %s38, %s39
      %p43 = pneg %p37
      %p44 = scmp.eq.s32.totalorder %s16, 11
      %p45 = por %p43, %p44
      %p46 = scmp.ne.s32.totalorder %s38, %s41
      %p47 = scmp.eq.s32.totalorder %s16, 0
      %p48 = por %p46, %p47
      %p49 = scmp.ne.s32.totalorder %s38, %s41
      %p50 = scmp.eq.s32.totalorder %s21, 11
      %p51 = por %p49, %p50
      %p52 = scmp.ne.s32.totalorder %s41, %s42
      %p53 = scmp.eq.s32.totalorder %s21, 0
      %p54 = por %p52, %p53
      %p55 = scmp.ne.s32.totalorder %s41, %s42
      %p56 = scmp.eq.s32.totalorder %s22, 11
      %p57 = por %p55, %p56
      %p59 = scmp.ne.s32.totalorder %s42, %s58
      %p60 = scmp.eq.s32.totalorder %s22, 0
      %p61 = por %p59, %p60
      %s63 = sadd.s32 %s62, 1
      %p66 = scmp.eq.s32.totalorder %s16, 11
      %p67 = scmp.ne.s32.totalorder %s62, %s64
      %p68 = scmp.eq.s32.totalorder %s16, 0
      %p69 = por %p67, %p68
      %p70 = scmp.ne.s32.totalorder %s62, %s64
      %p71 = scmp.eq.s32.totalorder %s21, 11
      %p72 = por %p70, %p71
      %p73 = scmp.ne.s32.totalorder %s64, %s65
      %p74 = scmp.eq.s32.totalorder %s21, 0
      %p75 = por %p73, %p74
      %p76 = scmp.ne.s32.totalorder %s64, %s65
      %p77 = scmp.eq.s32.totalorder %s22, 11
      %p78 = por %p76, %p77
      %p80 = scmp.ne.s32.totalorder %s65, %s79
      %p81 = scmp.eq.s32.totalorder %s22, 0
      %p82 = por %p80, %p81
      %s84 = sadd.s32 %s83, 1
      %p87 = scmp.eq.s32.totalorder %s16, 11
      %p88 = scmp.ne.s32.totalorder %s83, %s85
      %p89 = scmp.eq.s32.totalorder %s16, 0
      %p90 = por %p88, %p89
      %p91 = scmp.ne.s32.totalorder %s83, %s85
      %p92 = scmp.eq.s32.totalorder %s21, 11
      %p93 = por %p91, %p92
      %p94 = scmp.ne.s32.totalorder %s85, %s86
      %p95 = scmp.eq.s32.totalorder %s21, 0
      %p96 = por %p94, %p95
      %p97 = scmp.ne.s32.totalorder %s85, %s86
      %p98 = scmp.eq.s32.totalorder %s22, 11
      %p99 = por %p97, %p98
      %p101 = scmp.ne.s32.totalorder %s86, %s100
      %p102 = scmp.eq.s32.totalorder %s22, 0
      %p103 = por %p101, %p102
      %s105 = sadd.s32 %s104, 1
      %p108 = scmp.eq.s32.totalorder %s16, 11
      %p109 = scmp.ne.s32.totalorder %s104, %s106
      %p110 = scmp.eq.s32.totalorder %s16, 0
      %p111 = por %p109, %p110
      %p112 = scmp.ne.s32.totalorder %s104, %s106
      %p113 = scmp.eq.s32.totalorder %s21, 11
      %p114 = por %p112, %p113
      %p115 = scmp.ne.s32.totalorder %s106, %s107
      %p116 = scmp.eq.s32.totalorder %s21, 0
      %p117 = por %p115, %p116
      %p118 = scmp.ne.s32.totalorder %s106, %s107
      %p119 = scmp.eq.s32.totalorder %s22, 11
      %p120 = por %p118, %p119
      %p122 = scmp.ne.s32.totalorder %s107, %s121
      %p123 = scmp.eq.s32.totalorder %s22, 0
      %p124 = por %p122, %p123
      %s126 = sadd.s32 %s125, 1
      %p129 = scmp.eq.s32.totalorder %s16, 11
      %p130 = scmp.ne.s32.totalorder %s125, %s127
      %p131 = scmp.eq.s32.totalorder %s16, 0
      %p132 = por %p130, %p131
      %p133 = scmp.ne.s32.totalorder %s125, %s127
      %p134 = scmp.eq.s32.totalorder %s21, 11
      %p135 = por %p133, %p134
      %p136 = scmp.ne.s32.totalorder %s127, %s128
      %p137 = scmp.eq.s32.totalorder %s21, 0
      %p138 = por %p136, %p137
      %p139 = scmp.ne.s32.totalorder %s127, %s128
      %p140 = scmp.eq.s32.totalorder %s22, 11
      %p141 = por %p139, %p140
      %p143 = scmp.ne.s32.totalorder %s128, %s142
      %p144 = scmp.eq.s32.totalorder %s22, 0
      %p145 = por %p143, %p144
      %s146 = ssub.s32 %s23, %s35
      %p147 = scmp.eq.s32.totalorder %s146, 0
      %s149 = sadd.s32 %s148, 1
      %s150 = scalar_select %p147, %s148, %s149
      %p153 = pneg %p147
      %p154 = scmp.eq.s32.totalorder %s16, 11
      %p155 = por %p153, %p154
      %p156 = scmp.ne.s32.totalorder %s148, %s151
      %p157 = scmp.eq.s32.totalorder %s16, 0
      %p158 = por %p156, %p157
      %p159 = scmp.ne.s32.totalorder %s148, %s151
      %p160 = scmp.eq.s32.totalorder %s21, 11
      %p161 = por %p159, %p160
      %p162 = scmp.ne.s32.totalorder %s151, %s152
      %p163 = scmp.eq.s32.totalorder %s21, 0
      %p164 = por %p162, %p163
      %p165 = scmp.ne.s32.totalorder %s151, %s152
      %p166 = scmp.eq.s32.totalorder %s22, 11
      %p167 = por %p165, %p166
      %p169 = scmp.ne.s32.totalorder %s152, %s168
      %p170 = scmp.eq.s32.totalorder %s22, 0
      %p171 = por %p169, %p170
      %s172 = ssub.s32 %s23, %s35
      %p173 = scmp.eq.s32.totalorder %s172, 0
      %s175 = sadd.s32 %s174, 1
      %s176 = scalar_select %p173, %s174, %s175
      %p179 = pneg %p173
      %p180 = scmp.eq.s32.totalorder %s16, 11
      %p181 = por %p179, %p180
      %p182 = scmp.ne.s32.totalorder %s174, %s177
      %p183 = scmp.eq.s32.totalorder %s16, 0
      %p184 = por %p182, %p183
      %p185 = scmp.ne.s32.totalorder %s174, %s177
      %p186 = scmp.eq.s32.totalorder %s21, 11
      %p187 = por %p185, %p186
      %p188 = scmp.ne.s32.totalorder %s177, %s178
      %p189 = scmp.eq.s32.totalorder %s21, 0
      %p190 = por %p188, %p189
      %p191 = scmp.ne.s32.totalorder %s177, %s178
      %p192 = scmp.eq.s32.totalorder %s22, 11
      %p193 = por %p191, %p192
      %p195 = scmp.ne.s32.totalorder %s178, %s194
      %p196 = scmp.eq.s32.totalorder %s22, 0
      %p197 = por %p195, %p196
      %s198 = ssub.s32 %s24, %s31
      %s199 = ssub.s32 %s23, %s35
      %s200 = sor.u32 %s198, %s199
      %p201 = scmp.eq.s32.totalorder %s200, 0
      %s203 = sadd.s32 %s202, 1
      %s204 = scalar_select %p201, %s202, %s203
      %p207 = pneg %p201
      %p208 = scmp.eq.s32.totalorder %s16, 11
      %p209 = por %p207, %p208
      %p210 = scmp.ne.s32.totalorder %s202, %s205
      %p211 = scmp.eq.s32.totalorder %s16, 0
      %p212 = por %p210, %p211
      %p213 = scmp.ne.s32.totalorder %s202, %s205
      %p214 = scmp.eq.s32.totalorder %s21, 11
      %p215 = por %p213, %p214
      %p216 = scmp.ne.s32.totalorder %s205, %s206
      %p217 = scmp.eq.s32.totalorder %s21, 0
      %p218 = por %p216, %p217
      %p219 = scmp.ne.s32.totalorder %s205, %s206
      %p220 = scmp.eq.s32.totalorder %s22, 11
      %p221 = por %p219, %p220
      %p223 = scmp.ne.s32.totalorder %s206, %s222
      %p224 = scmp.eq.s32.totalorder %s22, 0
      %p225 = por %p223, %p224
      %p226 = scmp.le.s32.totalorder 1, %s16
      %p227 = scmp.lt.s32.totalorder %s16, 13
      %p228 = pnand %p226, %p227
      %p229 = pneg %p228
      // Predicated region
      $region9: #{tpu_custom_call.1} parent=5 // pred_check
        _
      $region10: #{tpu_custom_call.1} parent=5 // pred_check_branch
        %231 = sbr.rel (%p228) target = $region12
      $region11: #{tpu_custom_call.1} parent=5 // pred_region
        %s232 = ssub.s32 %s16, 1
        // Predicated region
        $region13: #{tpu_custom_call.1} parent=11 // pred_check
          %p233 = pneg %p75
        $region14: #{tpu_custom_call.1} parent=11 // pred_check_branch
          %235 = sbr.rel (%p233) target = $region16
        $region15: #{tpu_custom_call.1} parent=11 // pred_region
          _
        $region16: #{tpu_custom_call.1} parent=11 // pred_fallthru
          _
        // Predicated region
        $region17: #{tpu_custom_call.1} parent=11 // pred_check
          %p236 = pneg %p96
        $region18: #{tpu_custom_call.1} parent=11 // pred_check_branch
          %238 = sbr.rel (%p236) target = $region20
        $region19: #{tpu_custom_call.1} parent=11 // pred_region
          _
        $region20: #{tpu_custom_call.1} parent=11 // pred_fallthru
          _
        // Predicated region
        $region21: #{tpu_custom_call.1} parent=11 // pred_check
          %p239 = pneg %p117
        $region22: #{tpu_custom_call.1} parent=11 // pred_check_branch
          %241 = sbr.rel (%p239) target = $region24
        $region23: #{tpu_custom_call.1} parent=11 // pred_region
          _
        $region24: #{tpu_custom_call.1} parent=11 // pred_fallthru
          _
        // Predicated region
        $region25: #{tpu_custom_call.1} parent=11 // pred_check
          %p242 = pneg %p138
        $region26: #{tpu_custom_call.1} parent=11 // pred_check_branch
          %244 = sbr.rel (%p242) target = $region28
        $region27: #{tpu_custom_call.1} parent=11 // pred_region
          _
        $region28: #{tpu_custom_call.1} parent=11 // pred_fallthru
          _
      $region12: #{tpu_custom_call.1} parent=5 // pred_fallthru
        _
      %p245 = scmp.lt.s32.totalorder %s16, 12
      // Predicated region
      $region29: #{tpu_custom_call.1} parent=5 // pred_check
        %p246 = pneg %p245
      $region30: #{tpu_custom_call.1} parent=5 // pred_check_branch
        %248 = sbr.rel (%p246) target = $region32
      $region31: #{tpu_custom_call.1} parent=5 // pred_region
        // Predicated region
        $region33: #{tpu_custom_call.1} parent=31 // pred_check
          %p249 = pneg %p48
        $region34: #{tpu_custom_call.1} parent=31 // pred_check_branch
          %251 = sbr.rel (%p249) target = $region36
        $region35: #{tpu_custom_call.1} parent=31 // pred_region
          %s252 = smul.u32 8, %s24
          %s253 = ssub.s32 25, %s252
          %p254 = scmp.lt.s32.totalorder %s253, 8
          %s255 = scalar_select %p254, %s253, 8
          %s256 = smul.u32 64, %s255
          %p257 = scmp.lt.s32.totalorder %s252, 24
          %s258 = scalar_select %p257, %s252, 24
          %s259 = smul.addr %s258, 4
          %s260 = scalar_lea.vmem %s0, %s259
          %s261 = smul.u32 8, %s24
          %s262 = ssub.s32 25, %s261
          %p263 = scmp.lt.s32.totalorder %s262, 8
          %s264 = scalar_select %p263, %s262, 8
          %s265 = smul.u32 64, %s264
        $region36: #{tpu_custom_call.1} parent=31 // pred_fallthru
          _
        // Predicated region
        $region37: #{tpu_custom_call.1} parent=31 // pred_check
          %p266 = pneg %p158
        $region38: #{tpu_custom_call.1} parent=31 // pred_check_branch
          %268 = sbr.rel (%p266) target = $region40
        $region39: #{tpu_custom_call.1} parent=31 // pred_region
          %s269 = sand.u32 %s148, 1
          %s270 = sand.u32 %s148, 1
          %s271 = smul.addr %s270, 256
          %s272 = scalar_lea.vmem [#allocation2], %s271
          %s273 = smul.addr %s23, 4
          %s274 = scalar_lea.vmem %s5, %s273
          // Predicated region
          $region41: #{tpu_custom_call.1} parent=39 // pred_check
            _
          $region42: #{tpu_custom_call.1} parent=39 // pred_check_branch
            %276 = sbr.rel (0) target = $region44
          $region43: #{tpu_custom_call.1} parent=39 // pred_region
            // Predicated region
            $region45: #{tpu_custom_call.1} parent=43 // pred_check
              _
            $region46: #{tpu_custom_call.1} parent=43 // pred_check_branch
              %278 = sbr.rel target = $region48
            $region47: #{tpu_custom_call.1} parent=43 // pred_region
              // Predicated region
              $region60: #{tpu_custom_call.1} parent=47 // pred_check
                _
              $region61: #{tpu_custom_call.1} parent=47 // pred_check_branch
                %419 = sbr.rel (0) target = $region63
              $region62: #{tpu_custom_call.1} parent=47 // pred_region
                loop: start=0, step=1, limit=1
                $region64: #{tpu_custom_call.1} parent=62 // loop_pre_header
                  _
                $region65: #{tpu_custom_call.1} parent=62 // loop_header
                  %s421 = sphi 0, %s425
                  %p422 = scmp.ge.s32.totalorder %s421, 1
                  %s426 = sphi %s274, %s274
                  %s427 = sphi %s272, %s272
                $region66: #{tpu_custom_call.1} parent=62 // loop_header_branch
                  %424 = sbr.rel (%p422) target = $region70
                $region67: #{tpu_custom_call.1} parent=62 // loop_body
                  _
                $region68: #{tpu_custom_call.1} parent=62 // loop_footer
                  %s425 = sadd.s32 1, %s421
                $region69: #{tpu_custom_call.1} parent=62 // loop_footer_branch
                  %420 = sbr.rel target = $region65
                $region70: #{tpu_custom_call.1} parent=62 // loop_exit
                  _
                loop: start=0, step=1, limit=1
                $region71: #{tpu_custom_call.1} parent=62 // loop_pre_header
                  _
                $region72: #{tpu_custom_call.1} parent=62 // loop_header
                  %s430 = sphi 0, %s434
                  %p431 = scmp.ge.s32.totalorder %s430, 1
                  %s435 = sphi %s274, %s274
                  %s436 = sphi %s272, %s272
                $region73: #{tpu_custom_call.1} parent=62 // loop_header_branch
                  %433 = sbr.rel (%p431) target = $region77
                $region74: #{tpu_custom_call.1} parent=62 // loop_body
                  %v437 = vld [vmem:[%s435] sm:$0xf]
                  %438 = vst [vmem:[%s436] sm:$0xf] %v437
                  %v439 = vld [vmem:[%s435 + $0xc] sm:$0xf]
                  %440 = vst [vmem:[%s436 + $0x4] sm:$0xf] %v439
                  %v441 = vld [vmem:[%s435 + $0x18] sm:$0xf]
                  %442 = vst [vmem:[%s436 + $0x8] sm:$0xf] %v441
                  %v443 = vld [vmem:[%s435 + $0x24] sm:$0xf]
                  %444 = vst [vmem:[%s436 + $0xc] sm:$0xf] %v443
                  %v445 = vld [vmem:[%s435 + $0x30] sm:$0xf]
                  %446 = vst [vmem:[%s436 + $0x10] sm:$0xf] %v445
                  %v447 = vld [vmem:[%s435 + $0x3c] sm:$0xf]
                  %448 = vst [vmem:[%s436 + $0x14] sm:$0xf] %v447
                  %v449 = vld [vmem:[%s435 + $0x48] sm:$0xf]
                  %450 = vst [vmem:[%s436 + $0x18] sm:$0xf] %v449
                  %v451 = vld [vmem:[%s435 + $0x54] sm:$0xf]
                  %452 = vst [vmem:[%s436 + $0x1c] sm:$0xf] %v451
                  %v453 = vld [vmem:[%s435 + $0x60] sm:$0xf]
                  %454 = vst [vmem:[%s436 + $0x20] sm:$0xf] %v453
                  %v455 = vld [vmem:[%s435 + $0x6c] sm:$0xf]
                  %456 = vst [vmem:[%s436 + $0x24] sm:$0xf] %v455
                  %v457 = vld [vmem:[%s435 + $0x78] sm:$0xf]
                  %458 = vst [vmem:[%s436 + $0x28] sm:$0xf] %v457
                  %v459 = vld [vmem:[%s435 + $0x84] sm:$0xf]
                  %460 = vst [vmem:[%s436 + $0x2c] sm:$0xf] %v459
                  %v461 = vld [vmem:[%s435 + $0x90] sm:$0xf]
                  %462 = vst [vmem:[%s436 + $0x30] sm:$0xf] %v461
                  %v463 = vld [vmem:[%s435 + $0x9c] sm:$0xf]
                  %464 = vst [vmem:[%s436 + $0x34] sm:$0xf] %v463
                  %v465 = vld [vmem:[%s435 + $0xa8] sm:$0xf]
                  %466 = vst [vmem:[%s436 + $0x38] sm:$0xf] %v465
                  %v467 = vld [vmem:[%s435 + $0xb4] sm:$0xf]
                  %468 = vst [vmem:[%s436 + $0x3c] sm:$0xf] %v467
                  %v469 = vld [vmem:[%s435 + $0xc0] sm:$0xf]
                  %470 = vst [vmem:[%s436 + $0x40] sm:$0xf] %v469
                  %v471 = vld [vmem:[%s435 + $0xcc] sm:$0xf]
                  %472 = vst [vmem:[%s436 + $0x44] sm:$0xf] %v471
                  %v473 = vld [vmem:[%s435 + $0xd8] sm:$0xf]
                  %474 = vst [vmem:[%s436 + $0x48] sm:$0xf] %v473
                  %v475 = vld [vmem:[%s435 + $0xe4] sm:$0xf]
                  %476 = vst [vmem:[%s436 + $0x4c] sm:$0xf] %v475
                  %v477 = vld [vmem:[%s435 + $0xf0] sm:$0xf]
                  %478 = vst [vmem:[%s436 + $0x50] sm:$0xf] %v477
                  %v479 = vld [vmem:[%s435 + $0xfc] sm:$0xf]
                  %480 = vst [vmem:[%s436 + $0x54] sm:$0xf] %v479
                  %v481 = vld [vmem:[%s435 + $0x108] sm:$0xf]
                  %482 = vst [vmem:[%s436 + $0x58] sm:$0xf] %v481
                  %v483 = vld [vmem:[%s435 + $0x114] sm:$0xf]
                  %484 = vst [vmem:[%s436 + $0x5c] sm:$0xf] %v483
                  %v485 = vld [vmem:[%s435 + $0x120] sm:$0xf]
                  %486 = vst [vmem:[%s436 + $0x60] sm:$0xf] %v485
                  %v487 = vld [vmem:[%s435 + $0x12c] sm:$0xf]
                  %488 = vst [vmem:[%s436 + $0x64] sm:$0xf] %v487
                  %v489 = vld [vmem:[%s435 + $0x138] sm:$0xf]
                  %490 = vst [vmem:[%s436 + $0x68] sm:$0xf] %v489
                  %v491 = vld [vmem:[%s435 + $0x144] sm:$0xf]
                  %492 = vst [vmem:[%s436 + $0x6c] sm:$0xf] %v491
                  %v493 = vld [vmem:[%s435 + $0x150] sm:$0xf]
                  %494 = vst [vmem:[%s436 + $0x70] sm:$0xf] %v493
                  %v495 = vld [vmem:[%s435 + $0x15c] sm:$0xf]
                  %496 = vst [vmem:[%s436 + $0x74] sm:$0xf] %v495
                  %v497 = vld [vmem:[%s435 + $0x168] sm:$0xf]
                  %498 = vst [vmem:[%s436 + $0x78] sm:$0xf] %v497
                  %v499 = vld [vmem:[%s435 + $0x174] sm:$0xf]
                  %500 = vst [vmem:[%s436 + $0x7c] sm:$0xf] %v499
                  %v501 = vld [vmem:[%s435 + $0x180] sm:$0xf]
                  %502 = vst [vmem:[%s436 + $0x80] sm:$0xf] %v501
                  %v503 = vld [vmem:[%s435 + $0x18c] sm:$0xf]
                  %504 = vst [vmem:[%s436 + $0x84] sm:$0xf] %v503
                  %v505 = vld [vmem:[%s435 + $0x198] sm:$0xf]
                  %506 = vst [vmem:[%s436 + $0x88] sm:$0xf] %v505
                  %v507 = vld [vmem:[%s435 + $0x1a4] sm:$0xf]
                  %508 = vst [vmem:[%s436 + $0x8c] sm:$0xf] %v507
                  %v509 = vld [vmem:[%s435 + $0x1b0] sm:$0xf]
                  %510 = vst [vmem:[%s436 + $0x90] sm:$0xf] %v509
                  %v511 = vld [vmem:[%s435 + $0x1bc] sm:$0xf]
                  %512 = vst [vmem:[%s436 + $0x94] sm:$0xf] %v511
                  %v513 = vld [vmem:[%s435 + $0x1c8] sm:$0xf]
                  %514 = vst [vmem:[%s436 + $0x98] sm:$0xf] %v513
                  %v515 = vld [vmem:[%s435 + $0x1d4] sm:$0xf]
                  %516 = vst [vmem:[%s436 + $0x9c] sm:$0xf] %v515
                  %v517 = vld [vmem:[%s435 + $0x1e0] sm:$0xf]
                  %518 = vst [vmem:[%s436 + $0xa0] sm:$0xf] %v517
                  %v519 = vld [vmem:[%s435 + $0x1ec] sm:$0xf]
                  %520 = vst [vmem:[%s436 + $0xa4] sm:$0xf] %v519
                  %v521 = vld [vmem:[%s435 + $0x1f8] sm:$0xf]
                  %522 = vst [vmem:[%s436 + $0xa8] sm:$0xf] %v521
                  %v523 = vld [vmem:[%s435 + $0x204] sm:$0xf]
                  %524 = vst [vmem:[%s436 + $0xac] sm:$0xf] %v523
                  %v525 = vld [vmem:[%s435 + $0x210] sm:$0xf]
                  %526 = vst [vmem:[%s436 + $0xb0] sm:$0xf] %v525
                  %v527 = vld [vmem:[%s435 + $0x21c] sm:$0xf]
                  %528 = vst [vmem:[%s436 + $0xb4] sm:$0xf] %v527
                  %v529 = vld [vmem:[%s435 + $0x228] sm:$0xf]
                  %530 = vst [vmem:[%s436 + $0xb8] sm:$0xf] %v529
                  %v531 = vld [vmem:[%s435 + $0x234] sm:$0xf]
                  %532 = vst [vmem:[%s436 + $0xbc] sm:$0xf] %v531
                  %v533 = vld [vmem:[%s435 + $0x240] sm:$0xf]
                  %534 = vst [vmem:[%s436 + $0xc0] sm:$0xf] %v533
                  %v535 = vld [vmem:[%s435 + $0x24c] sm:$0xf]
                  %536 = vst [vmem:[%s436 + $0xc4] sm:$0xf] %v535
                  %v537 = vld [vmem:[%s435 + $0x258] sm:$0xf]
                  %538 = vst [vmem:[%s436 + $0xc8] sm:$0xf] %v537
                  %v539 = vld [vmem:[%s435 + $0x264] sm:$0xf]
                  %540 = vst [vmem:[%s436 + $0xcc] sm:$0xf] %v539
                  %v541 = vld [vmem:[%s435 + $0x270] sm:$0xf]
                  %542 = vst [vmem:[%s436 + $0xd0] sm:$0xf] %v541
                  %v543 = vld [vmem:[%s435 + $0x27c] sm:$0xf]
                  %544 = vst [vmem:[%s436 + $0xd4] sm:$0xf] %v543
                  %v545 = vld [vmem:[%s435 + $0x288] sm:$0xf]
                  %546 = vst [vmem:[%s436 + $0xd8] sm:$0xf] %v545
                  %v547 = vld [vmem:[%s435 + $0x294] sm:$0xf]
                  %548 = vst [vmem:[%s436 + $0xdc] sm:$0xf] %v547
                  %v549 = vld [vmem:[%s435 + $0x2a0] sm:$0xf]
                  %550 = vst [vmem:[%s436 + $0xe0] sm:$0xf] %v549
                  %v551 = vld [vmem:[%s435 + $0x2ac] sm:$0xf]
                  %552 = vst [vmem:[%s436 + $0xe4] sm:$0xf] %v551
                  %v553 = vld [vmem:[%s435 + $0x2b8] sm:$0xf]
                  %554 = vst [vmem:[%s436 + $0xe8] sm:$0xf] %v553
                  %v555 = vld [vmem:[%s435 + $0x2c4] sm:$0xf]
                  %556 = vst [vmem:[%s436 + $0xec] sm:$0xf] %v555
                  %v557 = vld [vmem:[%s435 + $0x2d0] sm:$0xf]
                  %558 = vst [vmem:[%s436 + $0xf0] sm:$0xf] %v557
                  %v559 = vld [vmem:[%s435 + $0x2dc] sm:$0xf]
                  %560 = vst [vmem:[%s436 + $0xf4] sm:$0xf] %v559
                  %v561 = vld [vmem:[%s435 + $0x2e8] sm:$0xf]
                  %562 = vst [vmem:[%s436 + $0xf8] sm:$0xf] %v561
                  %v563 = vld [vmem:[%s435 + $0x2f4] sm:$0xf]
                  %564 = vst [vmem:[%s436 + $0xfc] sm:$0xf] %v563
                $region75: #{tpu_custom_call.1} parent=62 // loop_footer
                  %s434 = sadd.s32 1, %s430
                $region76: #{tpu_custom_call.1} parent=62 // loop_footer_branch
                  %429 = sbr.rel target = $region72
                $region77: #{tpu_custom_call.1} parent=62 // loop_exit
                  _
              $region63: #{tpu_custom_call.1} parent=47 // pred_fallthru
                _
            $region48: #{tpu_custom_call.1} parent=43 // pred_fallthru
              _
            // Predicated region
            $region49: #{tpu_custom_call.1} parent=43 // pred_check
              _
            $region50: #{tpu_custom_call.1} parent=43 // pred_check_branch
              %280 = sbr.rel (0) target = $region52
            $region51: #{tpu_custom_call.1} parent=43 // pred_region
              loop: start=0, step=1, limit=1
              $region53: #{tpu_custom_call.1} parent=51 // loop_pre_header
                _
              $region54: #{tpu_custom_call.1} parent=51 // loop_header
                %s283 = sphi 0, %s287
                %p284 = scmp.ge.s32.totalorder %s283, 1
                %s288 = sphi %s274, %s274
                %s289 = sphi %s272, %s272
              $region55: #{tpu_custom_call.1} parent=51 // loop_header_branch
                %286 = sbr.rel (%p284) target = $region59
              $region56: #{tpu_custom_call.1} parent=51 // loop_body
                %v290 = vld [vmem:[%s288] sm:$0xf]
                %291 = vst [vmem:[%s289] sm:$0xf] %v290
                %v292 = vld [vmem:[%s288 + $0xc] sm:$0xf]
                %293 = vst [vmem:[%s289 + $0x4] sm:$0xf] %v292
                %v294 = vld [vmem:[%s288 + $0x18] sm:$0xf]
                %295 = vst [vmem:[%s289 + $0x8] sm:$0xf] %v294
                %v296 = vld [vmem:[%s288 + $0x24] sm:$0xf]
                %297 = vst [vmem:[%s289 + $0xc] sm:$0xf] %v296
                %v298 = vld [vmem:[%s288 + $0x30] sm:$0xf]
                %299 = vst [vmem:[%s289 + $0x10] sm:$0xf] %v298
                %v300 = vld [vmem:[%s288 + $0x3c] sm:$0xf]
                %301 = vst [vmem:[%s289 + $0x14] sm:$0xf] %v300
                %v302 = vld [vmem:[%s288 + $0x48] sm:$0xf]
                %303 = vst [vmem:[%s289 + $0x18] sm:$0xf] %v302
                %v304 = vld [vmem:[%s288 + $0x54] sm:$0xf]
                %305 = vst [vmem:[%s289 + $0x1c] sm:$0xf] %v304
                %v306 = vld [vmem:[%s288 + $0x60] sm:$0xf]
                %307 = vst [vmem:[%s289 + $0x20] sm:$0xf] %v306
                %v308 = vld [vmem:[%s288 + $0x6c] sm:$0xf]
                %309 = vst [vmem:[%s289 + $0x24] sm:$0xf] %v308
                %v310 = vld [vmem:[%s288 + $0x78] sm:$0xf]
                %311 = vst [vmem:[%s289 + $0x28] sm:$0xf] %v310
                %v312 = vld [vmem:[%s288 + $0x84] sm:$0xf]
                %313 = vst [vmem:[%s289 + $0x2c] sm:$0xf] %v312
                %v314 = vld [vmem:[%s288 + $0x90] sm:$0xf]
                %315 = vst [vmem:[%s289 + $0x30] sm:$0xf] %v314
                %v316 = vld [vmem:[%s288 + $0x9c] sm:$0xf]
                %317 = vst [vmem:[%s289 + $0x34] sm:$0xf] %v316
                %v318 = vld [vmem:[%s288 + $0xa8] sm:$0xf]
                %319 = vst [vmem:[%s289 + $0x38] sm:$0xf] %v318
                %v320 = vld [vmem:[%s288 + $0xb4] sm:$0xf]
                %321 = vst [vmem:[%s289 + $0x3c] sm:$0xf] %v320
                %v322 = vld [vmem:[%s288 + $0xc0] sm:$0xf]
                %323 = vst [vmem:[%s289 + $0x40] sm:$0xf] %v322
                %v324 = vld [vmem:[%s288 + $0xcc] sm:$0xf]
                %325 = vst [vmem:[%s289 + $0x44] sm:$0xf] %v324
                %v326 = vld [vmem:[%s288 + $0xd8] sm:$0xf]
                %327 = vst [vmem:[%s289 + $0x48] sm:$0xf] %v326
                %v328 = vld [vmem:[%s288 + $0xe4] sm:$0xf]
                %329 = vst [vmem:[%s289 + $0x4c] sm:$0xf] %v328
                %v330 = vld [vmem:[%s288 + $0xf0] sm:$0xf]
                %331 = vst [vmem:[%s289 + $0x50] sm:$0xf] %v330
                %v332 = vld [vmem:[%s288 + $0xfc] sm:$0xf]
                %333 = vst [vmem:[%s289 + $0x54] sm:$0xf] %v332
                %v334 = vld [vmem:[%s288 + $0x108] sm:$0xf]
                %335 = vst [vmem:[%s289 + $0x58] sm:$0xf] %v334
                %v336 = vld [vmem:[%s288 + $0x114] sm:$0xf]
                %337 = vst [vmem:[%s289 + $0x5c] sm:$0xf] %v336
                %v338 = vld [vmem:[%s288 + $0x120] sm:$0xf]
                %339 = vst [vmem:[%s289 + $0x60] sm:$0xf] %v338
                %v340 = vld [vmem:[%s288 + $0x12c] sm:$0xf]
                %341 = vst [vmem:[%s289 + $0x64] sm:$0xf] %v340
                %v342 = vld [vmem:[%s288 + $0x138] sm:$0xf]
                %343 = vst [vmem:[%s289 + $0x68] sm:$0xf] %v342
                %v344 = vld [vmem:[%s288 + $0x144] sm:$0xf]
                %345 = vst [vmem:[%s289 + $0x6c] sm:$0xf] %v344
                %v346 = vld [vmem:[%s288 + $0x150] sm:$0xf]
                %347 = vst [vmem:[%s289 + $0x70] sm:$0xf] %v346
                %v348 = vld [vmem:[%s288 + $0x15c] sm:$0xf]
                %349 = vst [vmem:[%s289 + $0x74] sm:$0xf] %v348
                %v350 = vld [vmem:[%s288 + $0x168] sm:$0xf]
                %351 = vst [vmem:[%s289 + $0x78] sm:$0xf] %v350
                %v352 = vld [vmem:[%s288 + $0x174] sm:$0xf]
                %353 = vst [vmem:[%s289 + $0x7c] sm:$0xf] %v352
                %v354 = vld [vmem:[%s288 + $0x180] sm:$0xf]
                %355 = vst [vmem:[%s289 + $0x80] sm:$0xf] %v354
                %v356 = vld [vmem:[%s288 + $0x18c] sm:$0xf]
                %357 = vst [vmem:[%s289 + $0x84] sm:$0xf] %v356
                %v358 = vld [vmem:[%s288 + $0x198] sm:$0xf]
                %359 = vst [vmem:[%s289 + $0x88] sm:$0xf] %v358
                %v360 = vld [vmem:[%s288 + $0x1a4] sm:$0xf]
                %361 = vst [vmem:[%s289 + $0x8c] sm:$0xf] %v360
                %v362 = vld [vmem:[%s288 + $0x1b0] sm:$0xf]
                %363 = vst [vmem:[%s289 + $0x90] sm:$0xf] %v362
                %v364 = vld [vmem:[%s288 + $0x1bc] sm:$0xf]
                %365 = vst [vmem:[%s289 + $0x94] sm:$0xf] %v364
                %v366 = vld [vmem:[%s288 + $0x1c8] sm:$0xf]
                %367 = vst [vmem:[%s289 + $0x98] sm:$0xf] %v366
                %v368 = vld [vmem:[%s288 + $0x1d4] sm:$0xf]
                %369 = vst [vmem:[%s289 + $0x9c] sm:$0xf] %v368
                %v370 = vld [vmem:[%s288 + $0x1e0] sm:$0xf]
                %371 = vst [vmem:[%s289 + $0xa0] sm:$0xf] %v370
                %v372 = vld [vmem:[%s288 + $0x1ec] sm:$0xf]
                %373 = vst [vmem:[%s289 + $0xa4] sm:$0xf] %v372
                %v374 = vld [vmem:[%s288 + $0x1f8] sm:$0xf]
                %375 = vst [vmem:[%s289 + $0xa8] sm:$0xf] %v374
                %v376 = vld [vmem:[%s288 + $0x204] sm:$0xf]
                %377 = vst [vmem:[%s289 + $0xac] sm:$0xf] %v376
                %v378 = vld [vmem:[%s288 + $0x210] sm:$0xf]
                %379 = vst [vmem:[%s289 + $0xb0] sm:$0xf] %v378
                %v380 = vld [vmem:[%s288 + $0x21c] sm:$0xf]
                %381 = vst [vmem:[%s289 + $0xb4] sm:$0xf] %v380
                %v382 = vld [vmem:[%s288 + $0x228] sm:$0xf]
                %383 = vst [vmem:[%s289 + $0xb8] sm:$0xf] %v382
                %v384 = vld [vmem:[%s288 + $0x234] sm:$0xf]
                %385 = vst [vmem:[%s289 + $0xbc] sm:$0xf] %v384
                %v386 = vld [vmem:[%s288 + $0x240] sm:$0xf]
                %387 = vst [vmem:[%s289 + $0xc0] sm:$0xf] %v386
                %v388 = vld [vmem:[%s288 + $0x24c] sm:$0xf]
                %389 = vst [vmem:[%s289 + $0xc4] sm:$0xf] %v388
                %v390 = vld [vmem:[%s288 + $0x258] sm:$0xf]
                %391 = vst [vmem:[%s289 + $0xc8] sm:$0xf] %v390
                %v392 = vld [vmem:[%s288 + $0x264] sm:$0xf]
                %393 = vst [vmem:[%s289 + $0xcc] sm:$0xf] %v392
                %v394 = vld [vmem:[%s288 + $0x270] sm:$0xf]
                %395 = vst [vmem:[%s289 + $0xd0] sm:$0xf] %v394
                %v396 = vld [vmem:[%s288 + $0x27c] sm:$0xf]
                %397 = vst [vmem:[%s289 + $0xd4] sm:$0xf] %v396
                %v398 = vld [vmem:[%s288 + $0x288] sm:$0xf]
                %399 = vst [vmem:[%s289 + $0xd8] sm:$0xf] %v398
                %v400 = vld [vmem:[%s288 + $0x294] sm:$0xf]
                %401 = vst [vmem:[%s289 + $0xdc] sm:$0xf] %v400
                %v402 = vld [vmem:[%s288 + $0x2a0] sm:$0xf]
                %403 = vst [vmem:[%s289 + $0xe0] sm:$0xf] %v402
                %v404 = vld [vmem:[%s288 + $0x2ac] sm:$0xf]
                %405 = vst [vmem:[%s289 + $0xe4] sm:$0xf] %v404
                %v406 = vld [vmem:[%s288 + $0x2b8] sm:$0xf]
                %407 = vst [vmem:[%s289 + $0xe8] sm:$0xf] %v406
                %v408 = vld [vmem:[%s288 + $0x2c4] sm:$0xf]
                %409 = vst [vmem:[%s289 + $0xec] sm:$0xf] %v408
                %v410 = vld [vmem:[%s288 + $0x2d0] sm:$0xf]
                %411 = vst [vmem:[%s289 + $0xf0] sm:$0xf] %v410
                %v412 = vld [vmem:[%s288 + $0x2dc] sm:$0xf]
                %413 = vst [vmem:[%s289 + $0xf4] sm:$0xf] %v412
                %v414 = vld [vmem:[%s288 + $0x2e8] sm:$0xf]
                %415 = vst [vmem:[%s289 + $0xf8] sm:$0xf] %v414
                %v416 = vld [vmem:[%s288 + $0x2f4] sm:$0xf]
                %417 = vst [vmem:[%s289 + $0xfc] sm:$0xf] %v416
              $region57: #{tpu_custom_call.1} parent=51 // loop_footer
                %s287 = sadd.s32 1, %s283
              $region58: #{tpu_custom_call.1} parent=51 // loop_footer_branch
                %282 = sbr.rel target = $region54
              $region59: #{tpu_custom_call.1} parent=51 // loop_exit
                _
            $region52: #{tpu_custom_call.1} parent=43 // pred_fallthru
              _
          $region44: #{tpu_custom_call.1} parent=39 // pred_fallthru
            _
          %565 = vnop
        $region40: #{tpu_custom_call.1} parent=31 // pred_fallthru
          _
        // Predicated region
        $region78: #{tpu_custom_call.1} parent=31 // pred_check
          %p566 = pneg %p184
        $region79: #{tpu_custom_call.1} parent=31 // pred_check_branch
          %568 = sbr.rel (%p566) target = $region81
        $region80: #{tpu_custom_call.1} parent=31 // pred_region
          %p569 = scmp.lt.s32.totalorder %s23, 2
          %s570 = scalar_select %p569, %s23, 2
          %s571 = scalar_lea.vmem %s6, %s570
        $region81: #{tpu_custom_call.1} parent=31 // pred_fallthru
          _
      $region32: #{tpu_custom_call.1} parent=5 // pred_fallthru
        _
      %p572 = scmp.le.s32.totalorder 1, %s16
      %p573 = scmp.lt.s32.totalorder %s16, 13
      %p574 = pnand %p572, %p573
      %p575 = pneg %p574
      // Predicated region
      $region82: #{tpu_custom_call.1} parent=5 // pred_check
        _
      $region83: #{tpu_custom_call.1} parent=5 // pred_check_branch
        %577 = sbr.rel (%p574) target = $region85
      $region84: #{tpu_custom_call.1} parent=5 // pred_region
        %s578 = ssub.s32 %s16, 1
        %s579 = sand.u32 %s151, 1
        %s580 = sand.u32 %s151, 1
        %s581 = smul.addr %s580, 256
        %s582 = scalar_lea.vmem [#allocation2], %s581
        // Predicated region
        $region86: #{tpu_custom_call.1} parent=84 // pred_check
          %p583 = pneg %p164
        $region87: #{tpu_custom_call.1} parent=84 // pred_check_branch
          %585 = sbr.rel (%p583) target = $region89
        $region88: #{tpu_custom_call.1} parent=84 // pred_region
          _
        $region89: #{tpu_custom_call.1} parent=84 // pred_fallthru
          _
        %s586 = smul.u32 8, %s26
        %s587 = ssub.s32 25, %s586
        %p588 = scmp.lt.s32.totalorder %s587, 8
        %s589 = scalar_select %p588, %s587, 8
        %s590 = smul.u32 64, %s589
        %p591 = scmp.lt.s32.totalorder %s586, 24
        %s592 = scalar_select %p591, %s586, 24
        %s593 = smul.addr %s592, 4
        %s594 = scalar_lea.vmem %s0, %s593
        %p595 = pneg %p54
        %p596 = pneg %p51
        %p597 = pneg %p75
        %p598 = pneg %p72
        %p599 = pneg %p96
        %p600 = pneg %p93
        %p601 = pneg %p117
        %p602 = pneg %p114
        %p603 = pneg %p138
        %p604 = pneg %p135
        %s605 = sand.u32 %s151, 1
        %s606 = sand.u32 %s151, 1
        %s607 = smul.addr %s606, 256
        %s608 = scalar_lea.vmem [#allocation2], %s607
        %p609 = pneg %p164
        %p610 = pneg %p161
        %p611 = scmp.lt.s32.totalorder %s25, 2
        %s612 = scalar_select %p611, %s25, 2
        %s613 = scalar_lea.vmem %s6, %s612
        %p614 = pneg %p190
        %p615 = pneg %p187
        %p616 = pneg %p218
        %p617 = pneg %p215
        %s618 = sand.u32 %s205, 1
        %s619 = scalar_lea.sflag [#allocation4], %s618
        %s620 = sand.u32 %s205, 1
        %s621 = smul.addr %s620, 32
        %s622 = scalar_lea.vmem [#allocation3], %s621
        %s623 = smul.u32 8, %s26
        %s624 = ssub.s32 25, %s623
        %p625 = scmp.lt.s32.totalorder %s624, 8
        %s626 = scalar_select %p625, %s624, 8
        %s627 = smul.u32 64, %s626
        %p628 = scmp.lt.s32.totalorder %s623, 24
        %s629 = scalar_select %p628, %s623, 24
        %s630 = smul.addr %s629, 4
        %s631 = scalar_lea.vmem %s0, %s630
        %s632 = smul.u32 8, %s26
        %s633 = ssub.s32 25, %s632
        %p634 = scmp.lt.s32.totalorder %s633, 8
        %s635 = scalar_select %p634, %s633, 8
        %s636 = smul.u32 64, %s635
        %p637 = scmp.lt.s32.totalorder %s25, 2
        %s638 = scalar_select %p637, %s25, 2
        %s639 = scalar_lea.vmem %s6, %s638
        %s640 = smul.u32 8, %s26
        %s641 = ssub.s32 25, %s640
        %p642 = scmp.lt.s32.totalorder %s641, 8
        %s643 = scalar_select %p642, %s641, 8
        %s644 = smul.u32 64, %s643
        %v646 = vld [vmem:[%s631] sm:$0xf]
        %v647 = vld [vmem:[%s631 + $0x4] sm:$0xf]
        %v648 = vld [vmem:[%s631 + $0x8] sm:$0xf]
        %v649 = vld [vmem:[%s631 + $0xc] sm:$0xf]
        %v650 = vld [vmem:[%s631 + $0x10] sm:$0xf]
        %v651 = vld [vmem:[%s631 + $0x14] sm:$0xf]
        %v652 = vld [vmem:[%s631 + $0x18] sm:$0xf]
        %v653 = vld [vmem:[%s631 + $0x1c] sm:$0xf]
        %v654 = vld [vmem:[%s1] sm:$0xff]
        %v655 = vld [vmem:[%s1 + $0x8] sm:$0xff]
        %v656 = vld [vmem:[%s1 + $0x10] sm:$0xff]
        %v657 = vld [vmem:[%s1 + $0x18] sm:$0xff]
        %v658 = vld [vmem:[%s2] sm:$0x3]
        %v660 = vlaneseq
        %v661 = vshrl.u32 %v660, 7
        %v662 = vsub.s32 0, %v661
        %v663 = vrot.slane %v658, %v662
        %v664 = vlaneseq
        %v665 = vshrl.u32 %v664, 7
        %v666 = vsub.s32 1, %v665
        %v667 = vrot.slane %v658, %v666
        %v678 = vunpack.c.l.b16 %v646
        %v679 = vunpack.c.l.b16 %v647
        %v680 = vunpack.c.l.b16 %v648
        %v681 = vunpack.c.l.b16 %v649
        %v682 = vunpack.c.l.b16 %v650
        %v683 = vunpack.c.l.b16 %v651
        %v684 = vunpack.c.l.b16 %v652
        %v685 = vunpack.c.l.b16 %v653
        %v686 = vpack.c.b16 %v679, %v678
        %v687 = vpack.c.b16 %v681, %v680
        %v688 = vpack.c.b16 %v683, %v682
        %v689 = vpack.c.b16 %v685, %v684
        %v694 = vunpack.c.l.b16 %v654
        %v695 = vunpack.c.h.b16 %v654
        %v696 = vunpack.c.l.b16 %v655
        %v697 = vunpack.c.h.b16 %v655
        %v698 = vunpack.c.l.b16 %v656
        %v699 = vunpack.c.h.b16 %v656
        %v700 = vunpack.c.l.b16 %v657
        %v701 = vunpack.c.h.b16 %v657
        %v702 = vpack.c.b16 %v696, %v694
        %v703 = vpack.c.b16 %v697, %v695
        %v704 = vpack.c.b16 %v700, %v698
        %v705 = vpack.c.b16 %v701, %v699
        %vm710 = vcmask 261120
        %v712 = vsel %vm710, %v686, 0
        %v715 = vsel %vm710, %v687, 0
        %v718 = vsel %vm710, %v688, 0
        %v721 = vsel %vm710, %v689, 0
        %723 = vmatprep.subr.bf16.mxu0 %v703
        %724 = vmatpush1.bf16.msra.mxu0 %v702
        %725 = vmatprep.subr.bf16.mxu0 %v705
        %726 = vmatpush1.bf16.msra.mxu0 %v704
        %727 = vmatprep.subr.bf16.mxu0 0
        %728 = vmatpush1.bf16.msra.mxu0 0
        %729 = vmatprep.subr.bf16.mxu0 0
        %730 = vmatpush1.bf16.msra.mxu0 0
        %731 = vmatprep.subr.bf16.mxu0 0
        %732 = vmatpush1.bf16.msra.mxu0 0
        %733 = vmatprep.subr.bf16.mxu0 0
        %734 = vmatpush1.bf16.msra.mxu0 0
        %735 = vmatprep.subr.bf16.mxu0 0
        %736 = vmatpush1.bf16.msra.mxu0 0
        %737 = vmatprep.subr.bf16.mxu0 0
        %738 = vmatpush1.bf16.msra.mxu0 0
        %739 = vmatprep.subr.bf16.mxu0 0
        %740 = vmatpush1.bf16.msra.mxu0 0
        %741 = vmatprep.subr.bf16.mxu0 0
        %742 = vmatpush1.bf16.msra.mxu0 0
        %743 = vmatprep.subr.bf16.mxu0 0
        %744 = vmatpush1.bf16.msra.mxu0 0
        %745 = vmatprep.subr.bf16.mxu0 0
        %746 = vmatpush1.bf16.msra.mxu0 0
        %747 = vmatprep.subr.bf16.mxu0 0
        %748 = vmatpush1.bf16.msra.mxu0 0
        %749 = vmatprep.subr.bf16.mxu0 0
        %750 = vmatpush1.bf16.msra.mxu0 0
        %751 = vmatprep.subr.bf16.mxu0 0
        %752 = vmatpush1.bf16.msra.mxu0 0
        %753 = vmatprep.subr.bf16.mxu0 0
        %754 = vmatpush1.bf16.msra.mxu0 0
        %755 = vmatprep.mubr.bf16.mxu0 0
        %756 = vmatmul.mubr.bf16.gmra.mrb[0].mxu0 %v712
        %v757 = vpop.f32.mrb[0].mxu0
        %v758 = vadd.f32 %v663, %v757
        %v759 = vpop.f32.mrb[0].mxu0
        %v760 = vadd.f32 %v667, %v759
        %v761 = vpop.f32.mrb[0].mxu0
        %v762 = vadd.f32 %v663, %v761
        %v763 = vpop.f32.mrb[0].mxu0
        %v764 = vadd.f32 %v667, %v763
        %765 = vmatprep.mubr.bf16.mxu0 0
        %766 = vmatmul.mubr.bf16.gmra.mrb[0].mxu0 %v715
        %v767 = vpop.f32.mrb[0].mxu0
        %v768 = vadd.f32 %v663, %v767
        %v769 = vpop.f32.mrb[0].mxu0
        %v770 = vadd.f32 %v667, %v769
        %v771 = vpop.f32.mrb[0].mxu0
        %v772 = vadd.f32 %v663, %v771
        %v773 = vpop.f32.mrb[0].mxu0
        %v774 = vadd.f32 %v667, %v773
        %775 = vmatprep.mubr.bf16.mxu0 0
        %776 = vmatmul.mubr.bf16.gmra.mrb[0].mxu0 %v718
        %v777 = vpop.f32.mrb[0].mxu0
        %v778 = vadd.f32 %v663, %v777
        %v779 = vpop.f32.mrb[0].mxu0
        %v780 = vadd.f32 %v667, %v779
        %v781 = vpop.f32.mrb[0].mxu0
        %v782 = vadd.f32 %v663, %v781
        %v783 = vpop.f32.mrb[0].mxu0
        %v784 = vadd.f32 %v667, %v783
        %785 = vmatprep.mubr.bf16.mxu0 0
        %786 = vmatmul.mubr.bf16.gmra.mrb[0].mxu0 %v721
        %v787 = vpop.f32.mrb[0].mxu0
        %v788 = vadd.f32 %v663, %v787
        %v789 = vpop.f32.mrb[0].mxu0
        %v790 = vadd.f32 %v667, %v789
        %v791 = vpop.f32.mrb[0].mxu0
        %v792 = vadd.f32 %v663, %v791
        %v793 = vpop.f32.mrb[0].mxu0
        %v794 = vadd.f32 %v667, %v793
        %795 = vdwg.mxu0
        %v796 = vmax.f32 %v758, 0.0
        %v797 = vmax.f32 %v760, 0.0
        %v798 = vmax.f32 %v762, 0.0
        %v799 = vmax.f32 %v764, 0.0
        %v800 = vmax.f32 %v768, 0.0
        %v801 = vmax.f32 %v770, 0.0
        %v802 = vmax.f32 %v772, 0.0
        %v803 = vmax.f32 %v774, 0.0
        %v804 = vmax.f32 %v778, 0.0
        %v805 = vmax.f32 %v780, 0.0
        %v806 = vmax.f32 %v782, 0.0
        %v807 = vmax.f32 %v784, 0.0
        %v808 = vmax.f32 %v788, 0.0
        %v809 = vmax.f32 %v790, 0.0
        %v810 = vmax.f32 %v792, 0.0
        %v811 = vmax.f32 %v794, 0.0
        %v812 = vpack.c.bf16 %v798, %v796
        %v813 = vpack.c.bf16 %v799, %v797
        %v814 = vpack.c.bf16 %v802, %v800
        %v815 = vpack.c.bf16 %v803, %v801
        %v816 = vpack.c.bf16 %v806, %v804
        %v817 = vpack.c.bf16 %v807, %v805
        %v818 = vpack.c.bf16 %v810, %v808
        %v819 = vpack.c.bf16 %v811, %v809
        %v820 = vld [vmem:[%s3] sm:$0xff]
        %v821 = vld [vmem:[%s3 + $0x8] sm:$0xff]
        %v822 = vld [vmem:[%s3 + $0x10] sm:$0xff]
        %v823 = vld [vmem:[%s3 + $0x18] sm:$0xff]
        %v824 = vld [vmem:[%s3 + $0x20] sm:$0xff]
        %v825 = vld [vmem:[%s3 + $0x28] sm:$0xff]
        %v826 = vld [vmem:[%s3 + $0x30] sm:$0xff]
        %v827 = vld [vmem:[%s3 + $0x38] sm:$0xff]
        %v828 = vld [vmem:[%s3 + $0x40] sm:$0xff]
        %v829 = vld [vmem:[%s3 + $0x48] sm:$0xff]
        %v830 = vld [vmem:[%s3 + $0x50] sm:$0xff]
        %v831 = vld [vmem:[%s3 + $0x58] sm:$0xff]
        %v832 = vld [vmem:[%s3 + $0x60] sm:$0xff]
        %v833 = vld [vmem:[%s3 + $0x68] sm:$0xff]
        %v834 = vld [vmem:[%s3 + $0x70] sm:$0xff]
        %v835 = vld [vmem:[%s3 + $0x78] sm:$0xff]
        %v836 = vld [vmem:[%s3 + $0x80] sm:$0xff]
        %v837 = vld [vmem:[%s3 + $0x88] sm:$0xff]
        %v838 = vld [vmem:[%s3 + $0x90] sm:$0xff]
        %v839 = vld [vmem:[%s3 + $0x98] sm:$0xff]
        %v840 = vld [vmem:[%s3 + $0xa0] sm:$0xff]
        %v841 = vld [vmem:[%s3 + $0xa8] sm:$0xff]
        %v842 = vld [vmem:[%s3 + $0xb0] sm:$0xff]
        %v843 = vld [vmem:[%s3 + $0xb8] sm:$0xff]
        %v844 = vld [vmem:[%s3 + $0xc0] sm:$0xff]
        %v845 = vld [vmem:[%s3 + $0xc8] sm:$0xff]
        %v846 = vld [vmem:[%s3 + $0xd0] sm:$0xff]
        %v847 = vld [vmem:[%s3 + $0xd8] sm:$0xff]
        %v848 = vld [vmem:[%s3 + $0xe0] sm:$0xff]
        %v849 = vld [vmem:[%s3 + $0xe8] sm:$0xff]
        %v850 = vld [vmem:[%s3 + $0xf0] sm:$0xff]
        %v851 = vld [vmem:[%s3 + $0xf8] sm:$0xff]
        %v852 = vld [vmem:[%s3 + $0x100] sm:$0xff]
        %v853 = vld [vmem:[%s3 + $0x108] sm:$0xff]
        %v854 = vld [vmem:[%s3 + $0x110] sm:$0xff]
        %v855 = vld [vmem:[%s3 + $0x118] sm:$0xff]
        %v856 = vld [vmem:[%s3 + $0x120] sm:$0xff]
        %v857 = vld [vmem:[%s3 + $0x128] sm:$0xff]
        %v858 = vld [vmem:[%s3 + $0x130] sm:$0xff]
        %v859 = vld [vmem:[%s3 + $0x138] sm:$0xff]
        %v860 = vld [vmem:[%s3 + $0x140] sm:$0xff]
        %v861 = vld [vmem:[%s3 + $0x148] sm:$0xff]
        %v862 = vld [vmem:[%s3 + $0x150] sm:$0xff]
        %v863 = vld [vmem:[%s3 + $0x158] sm:$0xff]
        %v864 = vld [vmem:[%s3 + $0x160] sm:$0xff]
        %v865 = vld [vmem:[%s3 + $0x168] sm:$0xff]
        %v866 = vld [vmem:[%s3 + $0x170] sm:$0xff]
        %v867 = vld [vmem:[%s3 + $0x178] sm:$0xff]
        %v868 = vld [vmem:[%s3 + $0x180] sm:$0xff]
        %v869 = vld [vmem:[%s3 + $0x188] sm:$0xff]
        %v870 = vld [vmem:[%s3 + $0x190] sm:$0xff]
        %v871 = vld [vmem:[%s3 + $0x198] sm:$0xff]
        %v872 = vld [vmem:[%s3 + $0x1a0] sm:$0xff]
        %v873 = vld [vmem:[%s3 + $0x1a8] sm:$0xff]
        %v874 = vld [vmem:[%s3 + $0x1b0] sm:$0xff]
        %v875 = vld [vmem:[%s3 + $0x1b8] sm:$0xff]
        %v876 = vld [vmem:[%s3 + $0x1c0] sm:$0xff]
        %v877 = vld [vmem:[%s3 + $0x1c8] sm:$0xff]
        %v878 = vld [vmem:[%s3 + $0x1d0] sm:$0xff]
        %v879 = vld [vmem:[%s3 + $0x1d8] sm:$0xff]
        %v880 = vld [vmem:[%s3 + $0x1e0] sm:$0xff]
        %v881 = vld [vmem:[%s3 + $0x1e8] sm:$0xff]
        %v882 = vld [vmem:[%s3 + $0x1f0] sm:$0xff]
        %v883 = vld [vmem:[%s3 + $0x1f8] sm:$0xff]
        %v884 = vld [vmem:[%s4] sm:$0xf]
        %v886 = vlaneseq
        %v887 = vshrl.u32 %v886, 7
        %v888 = vsub.s32 0, %v887
        %v889 = vrot.slane %v884, %v888
        %v890 = vlaneseq
        %v891 = vshrl.u32 %v890, 7
        %v892 = vsub.s32 1, %v891
        %v893 = vrot.slane %v884, %v892
        %v894 = vlaneseq
        %v895 = vshrl.u32 %v894, 7
        %v896 = vsub.s32 2, %v895
        %v897 = vrot.slane %v884, %v896
        %v898 = vlaneseq
        %v899 = vshrl.u32 %v898, 7
        %v900 = vsub.s32 3, %v899
        %v901 = vrot.slane %v884, %v900
        %v970 = vunpack.c.l.b16 %v820
        %v971 = vunpack.c.h.b16 %v820
        %v972 = vunpack.c.l.b16 %v821
        %v973 = vunpack.c.h.b16 %v821
        %v974 = vunpack.c.l.b16 %v822
        %v975 = vunpack.c.h.b16 %v822
        %v976 = vunpack.c.l.b16 %v823
        %v977 = vunpack.c.h.b16 %v823
        %v978 = vunpack.c.l.b16 %v824
        %v979 = vunpack.c.h.b16 %v824
        %v980 = vunpack.c.l.b16 %v825
        %v981 = vunpack.c.h.b16 %v825
        %v982 = vunpack.c.l.b16 %v826
        %v983 = vunpack.c.h.b16 %v826
        %v984 = vunpack.c.l.b16 %v827
        %v985 = vunpack.c.h.b16 %v827
        %v986 = vunpack.c.l.b16 %v828
        %v987 = vunpack.c.h.b16 %v828
        %v988 = vunpack.c.l.b16 %v829
        %v989 = vunpack.c.h.b16 %v829
        %v990 = vunpack.c.l.b16 %v830
        %v991 = vunpack.c.h.b16 %v830
        %v992 = vunpack.c.l.b16 %v831
        %v993 = vunpack.c.h.b16 %v831
        %v994 = vunpack.c.l.b16 %v832
        %v995 = vunpack.c.h.b16 %v832
        %v996 = vunpack.c.l.b16 %v833
        %v997 = vunpack.c.h.b16 %v833
        %v998 = vunpack.c.l.b16 %v834
        %v999 = vunpack.c.h.b16 %v834
        %v1000 = vunpack.c.l.b16 %v835
        %v1001 = vunpack.c.h.b16 %v835
        %v1002 = vunpack.c.l.b16 %v836
        %v1003 = vunpack.c.h.b16 %v836
        %v1004 = vunpack.c.l.b16 %v837
        %v1005 = vunpack.c.h.b16 %v837
        %v1006 = vunpack.c.l.b16 %v838
        %v1007 = vunpack.c.h.b16 %v838
        %v1008 = vunpack.c.l.b16 %v839
        %v1009 = vunpack.c.h.b16 %v839
        %v1010 = vunpack.c.l.b16 %v840
        %v1011 = vunpack.c.h.b16 %v840
        %v1012 = vunpack.c.l.b16 %v841
        %v1013 = vunpack.c.h.b16 %v841
        %v1014 = vunpack.c.l.b16 %v842
        %v1015 = vunpack.c.h.b16 %v842
        %v1016 = vunpack.c.l.b16 %v843
        %v1017 = vunpack.c.h.b16 %v843
        %v1018 = vunpack.c.l.b16 %v844
        %v1019 = vunpack.c.h.b16 %v844
        %v1020 = vunpack.c.l.b16 %v845
        %v1021 = vunpack.c.h.b16 %v845
        %v1022 = vunpack.c.l.b16 %v846
        %v1023 = vunpack.c.h.b16 %v846
        %v1024 = vunpack.c.l.b16 %v847
        %v1025 = vunpack.c.h.b16 %v847
        %v1026 = vunpack.c.l.b16 %v848
        %v1027 = vunpack.c.h.b16 %v848
        %v1028 = vunpack.c.l.b16 %v849
        %v1029 = vunpack.c.h.b16 %v849
        %v1030 = vunpack.c.l.b16 %v850
        %v1031 = vunpack.c.h.b16 %v850
        %v1032 = vunpack.c.l.b16 %v851
        %v1033 = vunpack.c.h.b16 %v851
        %v1034 = vunpack.c.l.b16 %v852
        %v1035 = vunpack.c.h.b16 %v852
        %v1036 = vunpack.c.l.b16 %v853
        %v1037 = vunpack.c.h.b16 %v853
        %v1038 = vunpack.c.l.b16 %v854
        %v1039 = vunpack.c.h.b16 %v854
        %v1040 = vunpack.c.l.b16 %v855
        %v1041 = vunpack.c.h.b16 %v855
        %v1042 = vunpack.c.l.b16 %v856
        %v1043 = vunpack.c.h.b16 %v856
        %v1044 = vunpack.c.l.b16 %v857
        %v1045 = vunpack.c.h.b16 %v857
        %v1046 = vunpack.c.l.b16 %v858
        %v1047 = vunpack.c.h.b16 %v858
        %v1048 = vunpack.c.l.b16 %v859
        %v1049 = vunpack.c.h.b16 %v859
        %v1050 = vunpack.c.l.b16 %v860
        %v1051 = vunpack.c.h.b16 %v860
        %v1052 = vunpack.c.l.b16 %v861
        %v1053 = vunpack.c.h.b16 %v861
        %v1054 = vunpack.c.l.b16 %v862
        %v1055 = vunpack.c.h.b16 %v862
        %v1056 = vunpack.c.l.b16 %v863
        %v1057 = vunpack.c.h.b16 %v863
        %v1058 = vunpack.c.l.b16 %v864
        %v1059 = vunpack.c.h.b16 %v864
        %v1060 = vunpack.c.l.b16 %v865
        %v1061 = vunpack.c.h.b16 %v865
        %v1062 = vunpack.c.l.b16 %v866
        %v1063 = vunpack.c.h.b16 %v866
        %v1064 = vunpack.c.l.b16 %v867
        %v1065 = vunpack.c.h.b16 %v867
        %v1066 = vunpack.c.l.b16 %v868
        %v1067 = vunpack.c.h.b16 %v868
        %v1068 = vunpack.c.l.b16 %v869
        %v1069 = vunpack.c.h.b16 %v869
        %v1070 = vunpack.c.l.b16 %v870
        %v1071 = vunpack.c.h.b16 %v870
        %v1072 = vunpack.c.l.b16 %v871
        %v1073 = vunpack.c.h.b16 %v871
        %v1074 = vunpack.c.l.b16 %v872
        %v1075 = vunpack.c.h.b16 %v872
        %v1076 = vunpack.c.l.b16 %v873
        %v1077 = vunpack.c.h.b16 %v873
        %v1078 = vunpack.c.l.b16 %v874
        %v1079 = vunpack.c.h.b16 %v874
        %v1080 = vunpack.c.l.b16 %v875
        %v1081 = vunpack.c.h.b16 %v875
        %v1082 = vunpack.c.l.b16 %v876
        %v1083 = vunpack.c.h.b16 %v876
        %v1084 = vunpack.c.l.b16 %v877
        %v1085 = vunpack.c.h.b16 %v877
        %v1086 = vunpack.c.l.b16 %v878
        %v1087 = vunpack.c.h.b16 %v878
        %v1088 = vunpack.c.l.b16 %v879
        %v1089 = vunpack.c.h.b16 %v879
        %v1090 = vunpack.c.l.b16 %v880
        %v1091 = vunpack.c.h.b16 %v880
        %v1092 = vunpack.c.l.b16 %v881
        %v1093 = vunpack.c.h.b16 %v881
        %v1094 = vunpack.c.l.b16 %v882
        %v1095 = vunpack.c.h.b16 %v882
        %v1096 = vunpack.c.l.b16 %v883
        %v1097 = vunpack.c.h.b16 %v883
        %v1098 = vpack.c.b16 %v974, %v970
        %v1099 = vpack.c.b16 %v975, %v971
        %v1100 = vpack.c.b16 %v976, %v972
        %v1101 = vpack.c.b16 %v977, %v973
        %v1102 = vpack.c.b16 %v982, %v978
        %v1103 = vpack.c.b16 %v983, %v979
        %v1104 = vpack.c.b16 %v984, %v980
        %v1105 = vpack.c.b16 %v985, %v981
        %v1106 = vpack.c.b16 %v990, %v986
        %v1107 = vpack.c.b16 %v991, %v987
        %v1108 = vpack.c.b16 %v992, %v988
        %v1109 = vpack.c.b16 %v993, %v989
        %v1110 = vpack.c.b16 %v998, %v994
        %v1111 = vpack.c.b16 %v999, %v995
        %v1112 = vpack.c.b16 %v1000, %v996
        %v1113 = vpack.c.b16 %v1001, %v997
        %v1114 = vpack.c.b16 %v1006, %v1002
        %v1115 = vpack.c.b16 %v1007, %v1003
        %v1116 = vpack.c.b16 %v1008, %v1004
        %v1117 = vpack.c.b16 %v1009, %v1005
        %v1118 = vpack.c.b16 %v1014, %v1010
        %v1119 = vpack.c.b16 %v1015, %v1011
        %v1120 = vpack.c.b16 %v1016, %v1012
        %v1121 = vpack.c.b16 %v1017, %v1013
        %v1122 = vpack.c.b16 %v1022, %v1018
        %v1123 = vpack.c.b16 %v1023, %v1019
        %v1124 = vpack.c.b16 %v1024, %v1020
        %v1125 = vpack.c.b16 %v1025, %v1021
        %v1126 = vpack.c.b16 %v1030, %v1026
        %v1127 = vpack.c.b16 %v1031, %v1027
        %v1128 = vpack.c.b16 %v1032, %v1028
        %v1129 = vpack.c.b16 %v1033, %v1029
        %v1130 = vpack.c.b16 %v1038, %v1034
        %v1131 = vpack.c.b16 %v1039, %v1035
        %v1132 = vpack.c.b16 %v1040, %v1036
        %v1133 = vpack.c.b16 %v1041, %v1037
        %v1134 = vpack.c.b16 %v1046, %v1042
        %v1135 = vpack.c.b16 %v1047, %v1043
        %v1136 = vpack.c.b16 %v1048, %v1044
        %v1137 = vpack.c.b16 %v1049, %v1045
        %v1138 = vpack.c.b16 %v1054, %v1050
        %v1139 = vpack.c.b16 %v1055, %v1051
        %v1140 = vpack.c.b16 %v1056, %v1052
        %v1141 = vpack.c.b16 %v1057, %v1053
        %v1142 = vpack.c.b16 %v1062, %v1058
        %v1143 = vpack.c.b16 %v1063, %v1059
        %v1144 = vpack.c.b16 %v1064, %v1060
        %v1145 = vpack.c.b16 %v1065, %v1061
        %v1146 = vpack.c.b16 %v1070, %v1066
        %v1147 = vpack.c.b16 %v1071, %v1067
        %v1148 = vpack.c.b16 %v1072, %v1068
        %v1149 = vpack.c.b16 %v1073, %v1069
        %v1150 = vpack.c.b16 %v1078, %v1074
        %v1151 = vpack.c.b16 %v1079, %v1075
        %v1152 = vpack.c.b16 %v1080, %v1076
        %v1153 = vpack.c.b16 %v1081, %v1077
        %v1154 = vpack.c.b16 %v1086, %v1082
        %v1155 = vpack.c.b16 %v1087, %v1083
        %v1156 = vpack.c.b16 %v1088, %v1084
        %v1157 = vpack.c.b16 %v1089, %v1085
        %v1158 = vpack.c.b16 %v1094, %v1090
        %v1159 = vpack.c.b16 %v1095, %v1091
        %v1160 = vpack.c.b16 %v1096, %v1092
        %v1161 = vpack.c.b16 %v1097, %v1093
        %1226 = vmatprep.subr.bf16.mxu0 %v1099
        %1227 = vmatpush1.bf16.msra.mxu0 %v1098
        %1228 = vmatprep.subr.bf16.mxu0 %v1103
        %1229 = vmatpush1.bf16.msra.mxu0 %v1102
        %1230 = vmatprep.subr.bf16.mxu0 %v1107
        %1231 = vmatpush1.bf16.msra.mxu0 %v1106
        %1232 = vmatprep.subr.bf16.mxu0 %v1111
        %1233 = vmatpush1.bf16.msra.mxu0 %v1110
        %1234 = vmatprep.subr.bf16.mxu0 %v1115
        %1235 = vmatpush1.bf16.msra.mxu0 %v1114
        %1236 = vmatprep.subr.bf16.mxu0 %v1119
        %1237 = vmatpush1.bf16.msra.mxu0 %v1118
        %1238 = vmatprep.subr.bf16.mxu0 %v1123
        %1239 = vmatpush1.bf16.msra.mxu0 %v1122
        %1240 = vmatprep.subr.bf16.mxu0 %v1127
        %1241 = vmatpush1.bf16.msra.mxu0 %v1126
        %1242 = vmatprep.subr.bf16.mxu0 %v1131
        %1243 = vmatpush1.bf16.msra.mxu0 %v1130
        %1244 = vmatprep.subr.bf16.mxu0 %v1135
        %1245 = vmatpush1.bf16.msra.mxu0 %v1134
        %1246 = vmatprep.subr.bf16.mxu0 %v1139
        %1247 = vmatpush1.bf16.msra.mxu0 %v1138
        %1248 = vmatprep.subr.bf16.mxu0 %v1143
        %1249 = vmatpush1.bf16.msra.mxu0 %v1142
        %1250 = vmatprep.subr.bf16.mxu0 %v1147
        %1251 = vmatpush1.bf16.msra.mxu0 %v1146
        %1252 = vmatprep.subr.bf16.mxu0 %v1151
        %1253 = vmatpush1.bf16.msra.mxu0 %v1150
        %1254 = vmatprep.subr.bf16.mxu0 %v1155
        %1255 = vmatpush1.bf16.msra.mxu0 %v1154
        %1256 = vmatprep.subr.bf16.mxu0 %v1159
        %1257 = vmatpush1.bf16.msra.mxu0 %v1158
        %1258 = vmatprep.mubr.bf16.mxu0 %v813
        %1259 = vmatmul.mubr.bf16.gmra.mrb[0].mxu0 %v812
        %v1260 = vpop.f32.mrb[0].mxu0
        %v1261 = vadd.f32 %v889, %v1260
        %v1262 = vpop.f32.mrb[0].mxu0
        %v1263 = vadd.f32 %v893, %v1262
        %v1264 = vpop.f32.mrb[0].mxu0
        %v1265 = vadd.f32 %v889, %v1264
        %v1266 = vpop.f32.mrb[0].mxu0
        %v1267 = vadd.f32 %v893, %v1266
        %1268 = vmatprep.mubr.bf16.mxu0 %v815
        %1269 = vmatmul.mubr.bf16.gmra.mrb[0].mxu0 %v814
        %v1270 = vpop.f32.mrb[0].mxu0
        %v1271 = vadd.f32 %v889, %v1270
        %v1272 = vpop.f32.mrb[0].mxu0
        %v1273 = vadd.f32 %v893, %v1272
        %v1274 = vpop.f32.mrb[0].mxu0
        %v1275 = vadd.f32 %v889, %v1274
        %v1276 = vpop.f32.mrb[0].mxu0
        %v1277 = vadd.f32 %v893, %v1276
        %1278 = vmatprep.mubr.bf16.mxu0 %v817
        %1279 = vmatmul.mubr.bf16.gmra.mrb[0].mxu0 %v816
        %v1280 = vpop.f32.mrb[0].mxu0
        %v1281 = vadd.f32 %v889, %v1280
        %v1282 = vpop.f32.mrb[0].mxu0
        %v1283 = vadd.f32 %v893, %v1282
        %v1284 = vpop.f32.mrb[0].mxu0
        %v1285 = vadd.f32 %v889, %v1284
        %v1286 = vpop.f32.mrb[0].mxu0
        %v1287 = vadd.f32 %v893, %v1286
        %1288 = vmatprep.mubr.bf16.mxu0 %v819
        %1289 = vmatmul.mubr.bf16.gmra.mrb[0].mxu0 %v818
        %v1290 = vpop.f32.mrb[0].mxu0
        %v1291 = vadd.f32 %v889, %v1290
        %v1292 = vpop.f32.mrb[0].mxu0
        %v1293 = vadd.f32 %v893, %v1292
        %v1294 = vpop.f32.mrb[0].mxu0
        %v1295 = vadd.f32 %v889, %v1294
        %v1296 = vpop.f32.mrb[0].mxu0
        %v1297 = vadd.f32 %v893, %v1296
        %1298 = vdwg.mxu0
        %1299 = vmatprep.subr.bf16.mxu0 %v1101
        %1300 = vmatpush1.bf16.msra.mxu0 %v1100
        %1301 = vmatprep.subr.bf16.mxu0 %v1105
        %1302 = vmatpush1.bf16.msra.mxu0 %v1104
        %1303 = vmatprep.subr.bf16.mxu0 %v1109
        %1304 = vmatpush1.bf16.msra.mxu0 %v1108
        %1305 = vmatprep.subr.bf16.mxu0 %v1113
        %1306 = vmatpush1.bf16.msra.mxu0 %v1112
        %1307 = vmatprep.subr.bf16.mxu0 %v1117
        %1308 = vmatpush1.bf16.msra.mxu0 %v1116
        %1309 = vmatprep.subr.bf16.mxu0 %v1121
        %1310 = vmatpush1.bf16.msra.mxu0 %v1120
        %1311 = vmatprep.subr.bf16.mxu0 %v1125
        %1312 = vmatpush1.bf16.msra.mxu0 %v1124
        %1313 = vmatprep.subr.bf16.mxu0 %v1129
        %1314 = vmatpush1.bf16.msra.mxu0 %v1128
        %1315 = vmatprep.subr.bf16.mxu0 %v1133
        %1316 = vmatpush1.bf16.msra.mxu0 %v1132
        %1317 = vmatprep.subr.bf16.mxu0 %v1137
        %1318 = vmatpush1.bf16.msra.mxu0 %v1136
        %1319 = vmatprep.subr.bf16.mxu0 %v1141
        %1320 = vmatpush1.bf16.msra.mxu0 %v1140
        %1321 = vmatprep.subr.bf16.mxu0 %v1145
        %1322 = vmatpush1.bf16.msra.mxu0 %v1144
        %1323 = vmatprep.subr.bf16.mxu0 %v1149
        %1324 = vmatpush1.bf16.msra.mxu0 %v1148
        %1325 = vmatprep.subr.bf16.mxu0 %v1153
        %1326 = vmatpush1.bf16.msra.mxu0 %v1152
        %1327 = vmatprep.subr.bf16.mxu0 %v1157
        %1328 = vmatpush1.bf16.msra.mxu0 %v1156
        %1329 = vmatprep.subr.bf16.mxu0 %v1161
        %1330 = vmatpush1.bf16.msra.mxu0 %v1160
        %1331 = vmatprep.mubr.bf16.mxu0 %v813
        %1332 = vmatmul.mubr.bf16.gmra.mrb[0].mxu0 %v812
        %v1333 = vpop.f32.mrb[0].mxu0
        %v1334 = vadd.f32 %v897, %v1333
        %v1335 = vpop.f32.mrb[0].mxu0
        %v1336 = vadd.f32 %v901, %v1335
        %v1337 = vpop.f32.mrb[0].mxu0
        %v1338 = vadd.f32 %v897, %v1337
        %v1339 = vpop.f32.mrb[0].mxu0
        %v1340 = vadd.f32 %v901, %v1339
        %1341 = vmatprep.mubr.bf16.mxu0 %v815
        %1342 = vmatmul.mubr.bf16.gmra.mrb[0].mxu0 %v814
        %v1343 = vpop.f32.mrb[0].mxu0
        %v1344 = vadd.f32 %v897, %v1343
        %v1345 = vpop.f32.mrb[0].mxu0
        %v1346 = vadd.f32 %v901, %v1345
        %v1347 = vpop.f32.mrb[0].mxu0
        %v1348 = vadd.f32 %v897, %v1347
        %v1349 = vpop.f32.mrb[0].mxu0
        %v1350 = vadd.f32 %v901, %v1349
        %1351 = vmatprep.mubr.bf16.mxu0 %v817
        %1352 = vmatmul.mubr.bf16.gmra.mrb[0].mxu0 %v816
        %v1353 = vpop.f32.mrb[0].mxu0
        %v1354 = vadd.f32 %v897, %v1353
        %v1355 = vpop.f32.mrb[0].mxu0
        %v1356 = vadd.f32 %v901, %v1355
        %v1357 = vpop.f32.mrb[0].mxu0
        %v1358 = vadd.f32 %v897, %v1357
        %v1359 = vpop.f32.mrb[0].mxu0
        %v1360 = vadd.f32 %v901, %v1359
        %1361 = vmatprep.mubr.bf16.mxu0 %v819
        %1362 = vmatmul.mubr.bf16.gmra.mrb[0].mxu0 %v818
        %v1363 = vpop.f32.mrb[0].mxu0
        %v1364 = vadd.f32 %v897, %v1363
        %v1365 = vpop.f32.mrb[0].mxu0
        %v1366 = vadd.f32 %v901, %v1365
        %v1367 = vpop.f32.mrb[0].mxu0
        %v1368 = vadd.f32 %v897, %v1367
        %v1369 = vpop.f32.mrb[0].mxu0
        %v1370 = vadd.f32 %v901, %v1369
        %1371 = vdwg.mxu0
        %v1372 = vmax.f32 %v1261, 0.0
        %v1373 = vmax.f32 %v1263, 0.0
        %v1374 = vmax.f32 %v1334, 0.0
        %v1375 = vmax.f32 %v1336, 0.0
        %v1376 = vmax.f32 %v1265, 0.0
        %v1377 = vmax.f32 %v1267, 0.0
        %v1378 = vmax.f32 %v1338, 0.0
        %v1379 = vmax.f32 %v1340, 0.0
        %v1380 = vmax.f32 %v1271, 0.0
        %v1381 = vmax.f32 %v1273, 0.0
        %v1382 = vmax.f32 %v1344, 0.0
        %v1383 = vmax.f32 %v1346, 0.0
        %v1384 = vmax.f32 %v1275, 0.0
        %v1385 = vmax.f32 %v1277, 0.0
        %v1386 = vmax.f32 %v1348, 0.0
        %v1387 = vmax.f32 %v1350, 0.0
        %v1388 = vmax.f32 %v1281, 0.0
        %v1389 = vmax.f32 %v1283, 0.0
        %v1390 = vmax.f32 %v1354, 0.0
        %v1391 = vmax.f32 %v1356, 0.0
        %v1392 = vmax.f32 %v1285, 0.0
        %v1393 = vmax.f32 %v1287, 0.0
        %v1394 = vmax.f32 %v1358, 0.0
        %v1395 = vmax.f32 %v1360, 0.0
        %v1396 = vmax.f32 %v1291, 0.0
        %v1397 = vmax.f32 %v1293, 0.0
        %v1398 = vmax.f32 %v1364, 0.0
        %v1399 = vmax.f32 %v1366, 0.0
        %v1400 = vmax.f32 %v1295, 0.0
        %v1401 = vmax.f32 %v1297, 0.0
        %v1402 = vmax.f32 %v1368, 0.0
        %v1403 = vmax.f32 %v1370, 0.0
        %v1404 = vpack.c.bf16 %v1376, %v1372
        %v1405 = vpack.c.bf16 %v1377, %v1373
        %v1406 = vpack.c.bf16 %v1378, %v1374
        %v1407 = vpack.c.bf16 %v1379, %v1375
        %v1408 = vpack.c.bf16 %v1384, %v1380
        %v1409 = vpack.c.bf16 %v1385, %v1381
        %v1410 = vpack.c.bf16 %v1386, %v1382
        %v1411 = vpack.c.bf16 %v1387, %v1383
        %v1412 = vpack.c.bf16 %v1392, %v1388
        %v1413 = vpack.c.bf16 %v1393, %v1389
        %v1414 = vpack.c.bf16 %v1394, %v1390
        %v1415 = vpack.c.bf16 %v1395, %v1391
        %v1416 = vpack.c.bf16 %v1400, %v1396
        %v1417 = vpack.c.bf16 %v1401, %v1397
        %v1418 = vpack.c.bf16 %v1402, %v1398
        %v1419 = vpack.c.bf16 %v1403, %v1399
        %v1420 = vld [vmem:[%s582] sm:$0xf]
        %v1421 = vld [vmem:[%s582 + $0x4] sm:$0xf]
        %v1422 = vld [vmem:[%s582 + $0x8] sm:$0xf]
        %v1423 = vld [vmem:[%s582 + $0xc] sm:$0xf]
        %v1424 = vld [vmem:[%s582 + $0x10] sm:$0xf]
        %v1425 = vld [vmem:[%s582 + $0x14] sm:$0xf]
        %v1426 = vld [vmem:[%s582 + $0x18] sm:$0xf]
        %v1427 = vld [vmem:[%s582 + $0x1c] sm:$0xf]
        %v1428 = vld [vmem:[%s582 + $0x20] sm:$0xf]
        %v1429 = vld [vmem:[%s582 + $0x24] sm:$0xf]
        %v1430 = vld [vmem:[%s582 + $0x28] sm:$0xf]
        %v1431 = vld [vmem:[%s582 + $0x2c] sm:$0xf]
        %v1432 = vld [vmem:[%s582 + $0x30] sm:$0xf]
        %v1433 = vld [vmem:[%s582 + $0x34] sm:$0xf]
        %v1434 = vld [vmem:[%s582 + $0x38] sm:$0xf]
        %v1435 = vld [vmem:[%s582 + $0x3c] sm:$0xf]
        %v1436 = vld [vmem:[%s582 + $0x40] sm:$0xf]
        %v1437 = vld [vmem:[%s582 + $0x44] sm:$0xf]
        %v1438 = vld [vmem:[%s582 + $0x48] sm:$0xf]
        %v1439 = vld [vmem:[%s582 + $0x4c] sm:$0xf]
        %v1440 = vld [vmem:[%s582 + $0x50] sm:$0xf]
        %v1441 = vld [vmem:[%s582 + $0x54] sm:$0xf]
        %v1442 = vld [vmem:[%s582 + $0x58] sm:$0xf]
        %v1443 = vld [vmem:[%s582 + $0x5c] sm:$0xf]
        %v1444 = vld [vmem:[%s582 + $0x60] sm:$0xf]
        %v1445 = vld [vmem:[%s582 + $0x64] sm:$0xf]
        %v1446 = vld [vmem:[%s582 + $0x68] sm:$0xf]
        %v1447 = vld [vmem:[%s582 + $0x6c] sm:$0xf]
        %v1448 = vld [vmem:[%s582 + $0x70] sm:$0xf]
        %v1449 = vld [vmem:[%s582 + $0x74] sm:$0xf]
        %v1450 = vld [vmem:[%s582 + $0x78] sm:$0xf]
        %v1451 = vld [vmem:[%s582 + $0x7c] sm:$0xf]
        %v1452 = vld [vmem:[%s582 + $0x80] sm:$0xf]
        %v1453 = vld [vmem:[%s582 + $0x84] sm:$0xf]
        %v1454 = vld [vmem:[%s582 + $0x88] sm:$0xf]
        %v1455 = vld [vmem:[%s582 + $0x8c] sm:$0xf]
        %v1456 = vld [vmem:[%s582 + $0x90] sm:$0xf]
        %v1457 = vld [vmem:[%s582 + $0x94] sm:$0xf]
        %v1458 = vld [vmem:[%s582 + $0x98] sm:$0xf]
        %v1459 = vld [vmem:[%s582 + $0x9c] sm:$0xf]
        %v1460 = vld [vmem:[%s582 + $0xa0] sm:$0xf]
        %v1461 = vld [vmem:[%s582 + $0xa4] sm:$0xf]
        %v1462 = vld [vmem:[%s582 + $0xa8] sm:$0xf]
        %v1463 = vld [vmem:[%s582 + $0xac] sm:$0xf]
        %v1464 = vld [vmem:[%s582 + $0xb0] sm:$0xf]
        %v1465 = vld [vmem:[%s582 + $0xb4] sm:$0xf]
        %v1466 = vld [vmem:[%s582 + $0xb8] sm:$0xf]
        %v1467 = vld [vmem:[%s582 + $0xbc] sm:$0xf]
        %v1468 = vld [vmem:[%s582 + $0xc0] sm:$0xf]
        %v1469 = vld [vmem:[%s582 + $0xc4] sm:$0xf]
        %v1470 = vld [vmem:[%s582 + $0xc8] sm:$0xf]
        %v1471 = vld [vmem:[%s582 + $0xcc] sm:$0xf]
        %v1472 = vld [vmem:[%s582 + $0xd0] sm:$0xf]
        %v1473 = vld [vmem:[%s582 + $0xd4] sm:$0xf]
        %v1474 = vld [vmem:[%s582 + $0xd8] sm:$0xf]
        %v1475 = vld [vmem:[%s582 + $0xdc] sm:$0xf]
        %v1476 = vld [vmem:[%s582 + $0xe0] sm:$0xf]
        %v1477 = vld [vmem:[%s582 + $0xe4] sm:$0xf]
        %v1478 = vld [vmem:[%s582 + $0xe8] sm:$0xf]
        %v1479 = vld [vmem:[%s582 + $0xec] sm:$0xf]
        %v1480 = vld [vmem:[%s582 + $0xf0] sm:$0xf]
        %v1481 = vld [vmem:[%s582 + $0xf4] sm:$0xf]
        %v1482 = vld [vmem:[%s582 + $0xf8] sm:$0xf]
        %v1483 = vld [vmem:[%s582 + $0xfc] sm:$0xf]
        %v1484 = vld [vmem:[%s639] sm:$0x1]
        %v1486 = vlaneseq
        %v1487 = vshrl.u32 %v1486, 7
        %v1488 = vsub.s32 0, %v1487
        %v1489 = vrot.slane %v1484, %v1488
        %v1555 = vunpack.c.l.b16 %v1420
        %v1556 = vunpack.c.l.b16 %v1421
        %v1557 = vunpack.c.l.b16 %v1422
        %v1558 = vunpack.c.l.b16 %v1423
        %v1559 = vunpack.c.l.b16 %v1424
        %v1560 = vunpack.c.l.b16 %v1425
        %v1561 = vunpack.c.l.b16 %v1426
        %v1562 = vunpack.c.l.b16 %v1427
        %v1563 = vunpack.c.l.b16 %v1428
        %v1564 = vunpack.c.l.b16 %v1429
        %v1565 = vunpack.c.l.b16 %v1430
        %v1566 = vunpack.c.l.b16 %v1431
        %v1567 = vunpack.c.l.b16 %v1432
        %v1568 = vunpack.c.l.b16 %v1433
        %v1569 = vunpack.c.l.b16 %v1434
        %v1570 = vunpack.c.l.b16 %v1435
        %v1571 = vunpack.c.l.b16 %v1436
        %v1572 = vunpack.c.l.b16 %v1437
        %v1573 = vunpack.c.l.b16 %v1438
        %v1574 = vunpack.c.l.b16 %v1439
        %v1575 = vunpack.c.l.b16 %v1440
        %v1576 = vunpack.c.l.b16 %v1441
        %v1577 = vunpack.c.l.b16 %v1442
        %v1578 = vunpack.c.l.b16 %v1443
        %v1579 = vunpack.c.l.b16 %v1444
        %v1580 = vunpack.c.l.b16 %v1445
        %v1581 = vunpack.c.l.b16 %v1446
        %v1582 = vunpack.c.l.b16 %v1447
        %v1583 = vunpack.c.l.b16 %v1448
        %v1584 = vunpack.c.l.b16 %v1449
        %v1585 = vunpack.c.l.b16 %v1450
        %v1586 = vunpack.c.l.b16 %v1451
        %v1587 = vunpack.c.l.b16 %v1452
        %v1588 = vunpack.c.l.b16 %v1453
        %v1589 = vunpack.c.l.b16 %v1454
        %v1590 = vunpack.c.l.b16 %v1455
        %v1591 = vunpack.c.l.b16 %v1456
        %v1592 = vunpack.c.l.b16 %v1457
        %v1593 = vunpack.c.l.b16 %v1458
        %v1594 = vunpack.c.l.b16 %v1459
        %v1595 = vunpack.c.l.b16 %v1460
        %v1596 = vunpack.c.l.b16 %v1461
        %v1597 = vunpack.c.l.b16 %v1462
        %v1598 = vunpack.c.l.b16 %v1463
        %v1599 = vunpack.c.l.b16 %v1464
        %v1600 = vunpack.c.l.b16 %v1465
        %v1601 = vunpack.c.l.b16 %v1466
        %v1602 = vunpack.c.l.b16 %v1467
        %v1603 = vunpack.c.l.b16 %v1468
        %v1604 = vunpack.c.l.b16 %v1469
        %v1605 = vunpack.c.l.b16 %v1470
        %v1606 = vunpack.c.l.b16 %v1471
        %v1607 = vunpack.c.l.b16 %v1472
        %v1608 = vunpack.c.l.b16 %v1473
        %v1609 = vunpack.c.l.b16 %v1474
        %v1610 = vunpack.c.l.b16 %v1475
        %v1611 = vunpack.c.l.b16 %v1476
        %v1612 = vunpack.c.l.b16 %v1477
        %v1613 = vunpack.c.l.b16 %v1478
        %v1614 = vunpack.c.l.b16 %v1479
        %v1615 = vunpack.c.l.b16 %v1480
        %v1616 = vunpack.c.l.b16 %v1481
        %v1617 = vunpack.c.l.b16 %v1482
        %v1618 = vunpack.c.l.b16 %v1483
        %v1619 = vpack.c.b16 %v1556, %v1555
        %v1620 = vpack.c.b16 %v1558, %v1557
        %v1621 = vpack.c.b16 %v1560, %v1559
        %v1622 = vpack.c.b16 %v1562, %v1561
        %v1623 = vpack.c.b16 %v1564, %v1563
        %v1624 = vpack.c.b16 %v1566, %v1565
        %v1625 = vpack.c.b16 %v1568, %v1567
        %v1626 = vpack.c.b16 %v1570, %v1569
        %v1627 = vpack.c.b16 %v1572, %v1571
        %v1628 = vpack.c.b16 %v1574, %v1573
        %v1629 = vpack.c.b16 %v1576, %v1575
        %v1630 = vpack.c.b16 %v1578, %v1577
        %v1631 = vpack.c.b16 %v1580, %v1579
        %v1632 = vpack.c.b16 %v1582, %v1581
        %v1633 = vpack.c.b16 %v1584, %v1583
        %v1634 = vpack.c.b16 %v1586, %v1585
        %v1635 = vpack.c.b16 %v1588, %v1587
        %v1636 = vpack.c.b16 %v1590, %v1589
        %v1637 = vpack.c.b16 %v1592, %v1591
        %v1638 = vpack.c.b16 %v1594, %v1593
        %v1639 = vpack.c.b16 %v1596, %v1595
        %v1640 = vpack.c.b16 %v1598, %v1597
        %v1641 = vpack.c.b16 %v1600, %v1599
        %v1642 = vpack.c.b16 %v1602, %v1601
        %v1643 = vpack.c.b16 %v1604, %v1603
        %v1644 = vpack.c.b16 %v1606, %v1605
        %v1645 = vpack.c.b16 %v1608, %v1607
        %v1646 = vpack.c.b16 %v1610, %v1609
        %v1647 = vpack.c.b16 %v1612, %v1611
        %v1648 = vpack.c.b16 %v1614, %v1613
        %v1649 = vpack.c.b16 %v1616, %v1615
        %v1650 = vpack.c.b16 %v1618, %v1617
        %1683 = vmatprep.subr.bf16.mxu0 0
        %1684 = vmatpush1.bf16.msra.mxu0 %v1619
        %1685 = vmatprep.subr.bf16.mxu0 0
        %1686 = vmatpush1.bf16.msra.mxu0 %v1620
        %1687 = vmatprep.subr.bf16.mxu0 0
        %1688 = vmatpush1.bf16.msra.mxu0 %v1621
        %1689 = vmatprep.subr.bf16.mxu0 0
        %1690 = vmatpush1.bf16.msra.mxu0 %v1622
        %1691 = vmatprep.subr.bf16.mxu0 0
        %1692 = vmatpush1.bf16.msra.mxu0 %v1623
        %1693 = vmatprep.subr.bf16.mxu0 0
        %1694 = vmatpush1.bf16.msra.mxu0 %v1624
        %1695 = vmatprep.subr.bf16.mxu0 0
        %1696 = vmatpush1.bf16.msra.mxu0 %v1625
        %1697 = vmatprep.subr.bf16.mxu0 0
        %1698 = vmatpush1.bf16.msra.mxu0 %v1626
        %1699 = vmatprep.subr.bf16.mxu0 0
        %1700 = vmatpush1.bf16.msra.mxu0 %v1627
        %1701 = vmatprep.subr.bf16.mxu0 0
        %1702 = vmatpush1.bf16.msra.mxu0 %v1628
        %1703 = vmatprep.subr.bf16.mxu0 0
        %1704 = vmatpush1.bf16.msra.mxu0 %v1629
        %1705 = vmatprep.subr.bf16.mxu0 0
        %1706 = vmatpush1.bf16.msra.mxu0 %v1630
        %1707 = vmatprep.subr.bf16.mxu0 0
        %1708 = vmatpush1.bf16.msra.mxu0 %v1631
        %1709 = vmatprep.subr.bf16.mxu0 0
        %1710 = vmatpush1.bf16.msra.mxu0 %v1632
        %1711 = vmatprep.subr.bf16.mxu0 0
        %1712 = vmatpush1.bf16.msra.mxu0 %v1633
        %1713 = vmatprep.subr.bf16.mxu0 0
        %1714 = vmatpush1.bf16.msra.mxu0 %v1634
        %1715 = vmatprep.mubr.bf16.mxu0 %v1405
        %1716 = vmatmul.mubr.bf16.gmra.mrb[0].mxu0 %v1404
        %v1717 = vpop.f32.mrb[0].mxu0
        %v1718 = vadd.f32 %v1489, %v1717
        %v1719 = vpop.f32.mrb[0].mxu0
        %v1720 = vpop.f32.mrb[0].mxu0
        %v1721 = vadd.f32 %v1489, %v1720
        %v1722 = vpop.f32.mrb[0].mxu0
        %1723 = vmatprep.mubr.bf16.mxu0 %v1409
        %1724 = vmatmul.mubr.bf16.gmra.mrb[0].mxu0 %v1408
        %v1725 = vpop.f32.mrb[0].mxu0
        %v1726 = vadd.f32 %v1489, %v1725
        %v1727 = vpop.f32.mrb[0].mxu0
        %v1728 = vpop.f32.mrb[0].mxu0
        %v1729 = vadd.f32 %v1489, %v1728
        %v1730 = vpop.f32.mrb[0].mxu0
        %1731 = vmatprep.mubr.bf16.mxu0 %v1413
        %1732 = vmatmul.mubr.bf16.gmra.mrb[0].mxu0 %v1412
        %v1733 = vpop.f32.mrb[0].mxu0
        %v1734 = vadd.f32 %v1489, %v1733
        %v1735 = vpop.f32.mrb[0].mxu0
        %v1736 = vpop.f32.mrb[0].mxu0
        %v1737 = vadd.f32 %v1489, %v1736
        %v1738 = vpop.f32.mrb[0].mxu0
        %1739 = vmatprep.mubr.bf16.mxu0 %v1417
        %1740 = vmatmul.mubr.bf16.gmra.mrb[0].mxu0 %v1416
        %v1741 = vpop.f32.mrb[0].mxu0
        %v1742 = vadd.f32 %v1489, %v1741
        %v1743 = vpop.f32.mrb[0].mxu0
        %v1744 = vpop.f32.mrb[0].mxu0
        %v1745 = vadd.f32 %v1489, %v1744
        %v1746 = vpop.f32.mrb[0].mxu0
        %1747 = vdwg.mxu0
        %1748 = vmatprep.subr.bf16.mxu0 0
        %1749 = vmatpush1.bf16.msra.mxu0 %v1635
        %1750 = vmatprep.subr.bf16.mxu0 0
        %1751 = vmatpush1.bf16.msra.mxu0 %v1636
        %1752 = vmatprep.subr.bf16.mxu0 0
        %1753 = vmatpush1.bf16.msra.mxu0 %v1637
        %1754 = vmatprep.subr.bf16.mxu0 0
        %1755 = vmatpush1.bf16.msra.mxu0 %v1638
        %1756 = vmatprep.subr.bf16.mxu0 0
        %1757 = vmatpush1.bf16.msra.mxu0 %v1639
        %1758 = vmatprep.subr.bf16.mxu0 0
        %1759 = vmatpush1.bf16.msra.mxu0 %v1640
        %1760 = vmatprep.subr.bf16.mxu0 0
        %1761 = vmatpush1.bf16.msra.mxu0 %v1641
        %1762 = vmatprep.subr.bf16.mxu0 0
        %1763 = vmatpush1.bf16.msra.mxu0 %v1642
        %1764 = vmatprep.subr.bf16.mxu0 0
        %1765 = vmatpush1.bf16.msra.mxu0 %v1643
        %1766 = vmatprep.subr.bf16.mxu0 0
        %1767 = vmatpush1.bf16.msra.mxu0 %v1644
        %1768 = vmatprep.subr.bf16.mxu0 0
        %1769 = vmatpush1.bf16.msra.mxu0 %v1645
        %1770 = vmatprep.subr.bf16.mxu0 0
        %1771 = vmatpush1.bf16.msra.mxu0 %v1646
        %1772 = vmatprep.subr.bf16.mxu0 0
        %1773 = vmatpush1.bf16.msra.mxu0 %v1647
        %1774 = vmatprep.subr.bf16.mxu0 0
        %1775 = vmatpush1.bf16.msra.mxu0 %v1648
        %1776 = vmatprep.subr.bf16.mxu0 0
        %1777 = vmatpush1.bf16.msra.mxu0 %v1649
        %1778 = vmatprep.subr.bf16.mxu0 0
        %1779 = vmatpush1.bf16.msra.mxu0 %v1650
        %1780 = vmatprep.mubr.bf16.mxu0 %v1407
        %1781 = vmatmul.mubr.bf16.gmra.mrb[0].mxu0 %v1406
        %v1782 = vpop.f32.mrb[0].mxu0
        %v1783 = vadd.f32 %v1718, %v1782
        %v1784 = vpop.f32.mrb[0].mxu0
        %v1785 = vpop.f32.mrb[0].mxu0
        %v1786 = vadd.f32 %v1721, %v1785
        %v1787 = vpop.f32.mrb[0].mxu0
        %1788 = vmatprep.mubr.bf16.mxu0 %v1411
        %1789 = vmatmul.mubr.bf16.gmra.mrb[0].mxu0 %v1410
        %v1790 = vpop.f32.mrb[0].mxu0
        %v1791 = vadd.f32 %v1726, %v1790
        %v1792 = vpop.f32.mrb[0].mxu0
        %v1793 = vpop.f32.mrb[0].mxu0
        %v1794 = vadd.f32 %v1729, %v1793
        %v1795 = vpop.f32.mrb[0].mxu0
        %1796 = vmatprep.mubr.bf16.mxu0 %v1415
        %1797 = vmatmul.mubr.bf16.gmra.mrb[0].mxu0 %v1414
        %v1798 = vpop.f32.mrb[0].mxu0
        %v1799 = vadd.f32 %v1734, %v1798
        %v1800 = vpop.f32.mrb[0].mxu0
        %v1801 = vpop.f32.mrb[0].mxu0
        %v1802 = vadd.f32 %v1737, %v1801
        %v1803 = vpop.f32.mrb[0].mxu0
        %1804 = vmatprep.mubr.bf16.mxu0 %v1419
        %1805 = vmatmul.mubr.bf16.gmra.mrb[0].mxu0 %v1418
        %v1806 = vpop.f32.mrb[0].mxu0
        %v1807 = vadd.f32 %v1742, %v1806
        %v1808 = vpop.f32.mrb[0].mxu0
        %v1809 = vpop.f32.mrb[0].mxu0
        %v1810 = vadd.f32 %v1745, %v1809
        %v1811 = vpop.f32.mrb[0].mxu0
        %1812 = vdwg.mxu0
        %v1813 = vpack.c.bf16 %v1786, %v1783
        %v1814 = vpack.c.bf16 %v1794, %v1791
        %v1815 = vpack.c.bf16 %v1802, %v1799
        %v1816 = vpack.c.bf16 %v1810, %v1807
        %v1821 = vunpack.c.l.b16 %v1813
        %v1822 = vunpack.c.h.b16 %v1813
        %v1823 = vunpack.c.l.b16 %v1814
        %v1824 = vunpack.c.h.b16 %v1814
        %v1825 = vunpack.c.l.b16 %v1815
        %v1826 = vunpack.c.h.b16 %v1815
        %v1827 = vunpack.c.l.b16 %v1816
        %v1828 = vunpack.c.h.b16 %v1816
        %v1829 = vpack.c.b16 %v1821, %v1821
        %v1830 = vpack.c.b16 %v1822, %v1822
        %v1831 = vpack.c.b16 %v1823, %v1823
        %v1832 = vpack.c.b16 %v1824, %v1824
        %v1833 = vpack.c.b16 %v1825, %v1825
        %v1834 = vpack.c.b16 %v1826, %v1826
        %v1835 = vpack.c.b16 %v1827, %v1827
        %v1836 = vpack.c.b16 %v1828, %v1828
        %1845 = vst [vmem:[%s622] sm:$0xf] %v1829
        %1846 = vst [vmem:[%s622 + $0x4] sm:$0xf] %v1830
        %1847 = vst [vmem:[%s622 + $0x8] sm:$0xf] %v1831
        %1848 = vst [vmem:[%s622 + $0xc] sm:$0xf] %v1832
        %1849 = vst [vmem:[%s622 + $0x10] sm:$0xf] %v1833
        %1850 = vst [vmem:[%s622 + $0x14] sm:$0xf] %v1834
        %1851 = vst [vmem:[%s622 + $0x18] sm:$0xf] %v1835
        %1852 = vst [vmem:[%s622 + $0x1c] sm:$0xf] %v1836
        %s1853 = sand.u32 %s205, 1
        %s1854 = scalar_lea.sflag [#allocation4], %s1853
        %s1855 = sand.u32 %s205, 1
        %s1856 = smul.addr %s1855, 32
        %s1857 = scalar_lea.vmem [#allocation3], %s1856
        // Predicated region
        $region90: #{tpu_custom_call.1} parent=84 // pred_check
          %p1858 = pneg %p215
        $region91: #{tpu_custom_call.1} parent=84 // pred_check_branch
          %1860 = sbr.rel (%p1858) target = $region93
        $region92: #{tpu_custom_call.1} parent=84 // pred_region
          %s1861 = smul.u32 8, %s26
          %s1862 = ssub.s32 25, %s1861
          %p1863 = scmp.lt.s32.totalorder %s1862, 8
          %s1864 = scalar_select %p1863, %s1862, 8
          %s1865 = smul.u32 64, %s1864
          %s1867 = ssub.s32 512, %s1865
          %1868 = vsyncadd %s1854, %s1867
          %p1869 = scmp.ne.s32.totalorder 0, %s1865
          %s1870 = smul.addr %s1861, 3
          %s1871 = sadd.s32 %s25, %s1870
          %s1872 = smul.addr %s1871, 64
          %s1873 = scalar_lea.hbm %s7, %s1872
          %s1874 = smul.u32 4, %s1864
          %s1875 = sshll.u32 %s1857, 4
          %s1876 = int_to_ptr.vmem [resolvable:$true] %s1875
          %s1877 = sshll.u32 %s1874, 4
          %1881 = dma.vmem_to_hbm [thread:$0]  (%p1869), %s1876, %s1877, %s1873, %s1854, 64, 192, 4
        $region93: #{tpu_custom_call.1} parent=84 // pred_fallthru
          _
      $region85: #{tpu_custom_call.1} parent=5 // pred_fallthru
        _
      %p1882 = scmp.le.s32.totalorder 2, %s16
      // Predicated region
      $region94: #{tpu_custom_call.1} parent=5 // pred_check
        %p1883 = pneg %p1882
      $region95: #{tpu_custom_call.1} parent=5 // pred_check_branch
        %1885 = sbr.rel (%p1883) target = $region97
      $region96: #{tpu_custom_call.1} parent=5 // pred_region
        %s1886 = ssub.s32 %s16, 2
        // Predicated region
        $region98: #{tpu_custom_call.1} parent=96 // pred_check
          %p1887 = pneg %p221
        $region99: #{tpu_custom_call.1} parent=96 // pred_check_branch
          %1889 = sbr.rel (%p1887) target = $region101
        $region100: #{tpu_custom_call.1} parent=96 // pred_region
          %s1890 = sand.u32 %s206, 1
          %s1891 = scalar_lea.sflag [#allocation4], %s1890
          %s1892 = sand.u32 %s206, 1
          %s1893 = smul.addr %s1892, 32
          %s1894 = scalar_lea.vmem [#allocation3], %s1893
          %1895 = dma.done %s1891, 512
        $region101: #{tpu_custom_call.1} parent=96 // pred_fallthru
          _
      $region97: #{tpu_custom_call.1} parent=5 // pred_fallthru
        _
    $region6: #{tpu_custom_call.1} parent=1 // loop_footer
      %s20 = sadd.s32 1, %s16
    $region7: #{tpu_custom_call.1} parent=1 // loop_footer_branch
      %15 = sbr.rel target = $region3
    $region8: #{tpu_custom_call.1} parent=1 // loop_exit
      _
    %1896 = vsyncpa [#allocation4], 1
    %s1897 = scalar_lea.sflag [#allocation4], 1
    %1898 = vsyncpa %s1897, 1

</llo_original>
